<compile_context>
chip_gen: v5e
topology: v5e:2x2
jax: 0.10.0
libtpu: 0.0.40
codegen_flags: <defaults>
</compile_context>

<pallas_src>
import functools

import jax
import jax.numpy as jnp
from jax import lax
from jax.experimental import pallas as pl
from jax.experimental.pallas import tpu as pltpu


_BB = 8              # batch rows per grid block (f32 sublane tile)
_UNROLL_MAX_T = 8    # fully unroll the time loop at trace time for short seqs


# ----------------------------------------------------------------------------
# Fused forward kernel builder
# ----------------------------------------------------------------------------
def _build_kernel(*, BB, T, V, E, H, L, ND, NL, use_scratch):
    N = T * BB                     # time-major rows in one block: n = t*BB + b
    n_lstm = 3 * ND * L            # (w_ih, w_hh, bias) per layer per direction
    n_mlp = 2 * NL + 2             # hidden (W, b) pairs + final (w_row, b)
    n_in = 2 + n_lstm + n_mlp      # tokens + embedding table + weights

    def kernel(*refs):
        tok_ref, emb_ref = refs[0], refs[1]
        lstm_w = refs[2:2 + n_lstm]
        mlp_w = refs[2 + n_lstm:n_in]
        out_ref = refs[n_in]
        scratch = refs[n_in + 1:]
        if use_scratch:
            xg_scr = scratch[:ND]          # ND x [T*BB, 4H] f32
            h_scr = scratch[ND:2 * ND]     # ND x [T*BB, H]  f32

        def affine(parts, w_ref, b_ref):
            """concat(parts) @ W + b without materializing the concat: the
            weight ref is row-sliced per feature part (bf16 MXU matmuls with
            f32 accumulation)."""
            acc = None
            off = 0
            for p in parts:
                w_blk = w_ref[off:off + p.shape[1], :]
                y = jnp.dot(p.astype(jnp.bfloat16), w_blk,
                            preferred_element_type=jnp.float32)
                acc = y if acc is None else acc + y
                off += p.shape[1]
            return acc + b_ref[...]

        # ---- embedding: exact one-hot row-select as a bf16 MXU matmul ------
        tok = tok_ref[...]                                      # [N, 1] int32
        vocab_ids = lax.broadcasted_iota(jnp.int32, (N, V), 1)
        onehot = (tok == vocab_ids).astype(jnp.bfloat16)        # exact 0/1
        x = jnp.dot(onehot, emb_ref[...],
                    preferred_element_type=jnp.float32)         # [N, E] f32

        def cell(g, c):
            # Gate columns pre-permuted in the wrapper to [i, f, o, g]:
            # one sigmoid over the contiguous [BB, 3H] slice + one tanh.
            s = jax.nn.sigmoid(g[:, :3 * H])
            g_in = jnp.tanh(g[:, 3 * H:])
            c_new = s[:, H:2 * H] * c + s[:, :H] * g_in
            h_new = s[:, 2 * H:3 * H] * jnp.tanh(c_new)
            return h_new, c_new

        # ---- LSTM stack: fwd/bwd interleaved in ONE serial time loop -------
        parts = [x]
        for layer in range(L):
            # Input projection for ALL timesteps of each direction in one big
            # matmul; only the h @ W_hh recurrence stays serial.
            whh = []
            xg = []
            for d in range(ND):
                base = 3 * (layer * ND + d)
                g_all = affine(parts, lstm_w[base + 0], lstm_w[base + 2])
                whh.append(lstm_w[base + 1][...])               # [H, 4H] bf16
                if use_scratch:
                    xg_scr[d][...] = g_all                      # [T*BB, 4H]
                else:
                    xg.append(g_all)

            if not use_scratch:
                # Short T: static slices, outputs kept as values.
                hs = [[None] * T for _ in range(ND)]
                state = [(jnp.zeros((BB, H), jnp.float32),
                          jnp.zeros((BB, H), jnp.float32)) for _ in range(ND)]
                for t in range(T):
                    for d in range(ND):
                        tt = t if d == 0 else (T - 1) - t   # bwd = index math
                        h, c = state[d]
                        g = xg[d][tt * BB:(tt + 1) * BB, :] + jnp.dot(
                            h.astype(jnp.bfloat16), whh[d],
                            preferred_element_type=jnp.float32)
                        h, c = cell(g, c)
                        state[d] = (h, c)
                        hs[d][tt] = h
                parts = [jnp.concatenate(hs[d], axis=0) for d in range(ND)]
            else:
                # Long T: 2-D VMEM slabs + moderately unrolled fori_loop.
                def step(t, carry):
                    new = []
                    for d in range(ND):
                        tt = t if d == 0 else (T - 1) - t
                        row = pl.multiple_of(tt * BB, BB)
                        h, c = carry[2 * d], carry[2 * d + 1]
                        g = xg_scr[d][pl.ds(row, BB), :] + jnp.dot(
                            h.astype(jnp.bfloat16), whh[d],
                            preferred_element_type=jnp.float32)
                        h, c = cell(g, c)
                        h_scr[d][pl.ds(row, BB), :] = h
                        new += [h, c]
                    return tuple(new)

                init = tuple(jnp.zeros((BB, H), jnp.float32)
                             for _ in range(2 * ND))
                lax.fori_loop(0, T, step, init, unroll=4)
                parts = [h_scr[d][...] for d in range(ND)]
            # TODO(synk): inter-layer LSTM dropout (training mode) skipped.

        # ---- MLP head: [Linear->ReLU(->Dropout)]*NL -> Linear(H,1)->sigmoid
        for li in range(NL):
            h = jnp.maximum(
                affine(parts, mlp_w[2 * li], mlp_w[2 * li + 1]), 0.0)
            parts = [h]
            # TODO(synk): dropout (training mode) is identity here.

        # Final Linear(H, 1) as a lane reduction (no 1-column MXU matmul).
        h3 = parts[0].reshape(T, BB, H)              # tile-aligned sublane split
        w_out = mlp_w[-2][...].reshape(1, 1, H)      # [1, 1, H] f32
        b_out = mlp_w[-1][...]                       # [1, 1]    f32
        y = jnp.sum(h3 * w_out, axis=-1) + b_out     # [T, BB]
        out_ref[...] = jax.nn.sigmoid(y).reshape(1, T, BB)

    return kernel, n_in


# ----------------------------------------------------------------------------
# Full forward pass (wrapper)
# ----------------------------------------------------------------------------
def amr_baseline_forward(tokens, params, config):
    B, T = tokens.shape
    V, E = params["embedding"].shape
    H = config["hidden_dim"]
    L = config["num_rnn_layers"]
    ND = 2 if config["bidirectional"] else 1
    NL = config["num_linear_layers"]
    # Same constraint as the PyTorch module: the final Linear takes H inputs.
    assert NL >= 1 or ND == 1, "bidirectional requires num_linear_layers >= 1"

    BB = _BB
    G = pl.cdiv(B, BB)
    B_pad = G * BB
    N_blk = T * BB
    use_scratch = T > _UNROLL_MAX_T

    kernel, _ = _build_kernel(BB=BB, T=T, V=V, E=E, H=H, L=L, ND=ND, NL=NL,
                              use_scratch=use_scratch)

    # ---- layout plumbing (wrapper-side, cheap XLA ops) ----------------------
    # tokens -> per-block, time-major row column: row t*BB + b of block g is
    # tokens[g*BB + b, t].  Padded rows use token 0 and are sliced off below.
    tok = jnp.zeros((B_pad, T), jnp.int32).at[:B, :].set(tokens.astype(jnp.int32))
    tok_col = tok.reshape(G, BB, T).transpose(0, 2, 1).reshape(G * N_blk, 1)

    def perm_gates(w):
        # PyTorch gate column order (i, f, g, o) -> (i, f, o, g) so the kernel
        # applies one sigmoid over [:, :3H] and one tanh over [:, 3H:].
        return jnp.concatenate([w[..., 0:H], w[..., H:2 * H],
                                w[..., 3 * H:4 * H], w[..., 2 * H:3 * H]],
                               axis=-1)

    flat_w = []
    for layer_p in params["lstm"]:
        for dname in (("fwd", "bwd") if ND == 2 else ("fwd",)):
            w_ih, w_hh, b = layer_p[dname]
            # MXU operands in bf16; biases / accumulation stay f32.
            flat_w += [perm_gates(w_ih).astype(jnp.bfloat16),
                       perm_gates(w_hh).astype(jnp.bfloat16),
                       perm_gates(b)]
    mlp = params["mlp"]
    for li in range(NL):
        flat_w += [mlp[2 * li].astype(jnp.bfloat16), mlp[2 * li + 1]]
    flat_w += [mlp[-2], mlp[-1]]        # final row weight [1, H] + bias [1, 1]

    # bf16 table: one-hot row-select stays exact; only table values round.
    emb = params["embedding"].astype(jnp.bfloat16)

    in_specs = [pl.BlockSpec((N_blk, 1), lambda g: (g, 0)),     # tokens
                pl.BlockSpec((V, E), lambda g: (0, 0))]         # table (resident)
    in_specs += [pl.BlockSpec(w.shape, lambda g: (0, 0)) for w in flat_w]

    out_specs = pl.BlockSpec((1, T, BB), lambda g: (g, 0, 0))
    out_shape = jax.ShapeDtypeStruct((G, T, BB), jnp.float32)

    scratch = []
    if use_scratch:
        scratch += [pltpu.VMEM((N_blk, 4 * H), jnp.float32) for _ in range(ND)]
        scratch += [pltpu.VMEM((N_blk, H), jnp.float32) for _ in range(ND)]

    # ---- explicit VMEM budget (v7x: 64 MiB physical / 32 MiB scoped default)
    def nbytes(a):
        return a.size * a.dtype.itemsize
    weight_bytes = nbytes(emb) + sum(nbytes(w) for w in flat_w)
    act_bytes = (N_blk * V * 2                      # one-hot (bf16)
                 + ND * N_blk * 4 * H * 4 * 2       # gate slabs (value/scratch)
                 + (2 + ND) * N_blk * H * 4)        # hidden slabs / MLP acts
    est = 2 * weight_bytes + act_bytes + 2 * (N_blk * 4 + T * BB * 4)
    vmem_limit = int(min(64 * 2 ** 20, max(24 * 2 ** 20, 2 * est)))

    y = pl.pallas_call(
        kernel,
        out_shape=out_shape,
        grid_spec=pltpu.PrefetchScalarGridSpec(
            num_scalar_prefetch=0,
            grid=(G,),
            in_specs=in_specs,
            out_specs=out_specs,
            scratch_shapes=scratch),
        compiler_params=pltpu.CompilerParams(
            dimension_semantics=("parallel",),      # use both TCs on v7x
            vmem_limit_bytes=vmem_limit),
    )(tok_col, emb, *flat_w)

    # [G, T, BB] -> [B_pad, T] -> drop padded batch rows (== torch .squeeze()).
    return y.transpose(0, 2, 1).reshape(B_pad, T)[:B, :]


# ----------------------------------------------------------------------------
# Deterministic parameter construction (normal(0, 0.1), as in the PyTorch init)
# ----------------------------------------------------------------------------
def init_params(key, config, vocab_size):
    E = config["embedding_dim"]
    H = config["hidden_dim"]
    ND = 2 if config["bidirectional"] else 1

    def nrm(k, shape):
        return jax.random.normal(k, shape, dtype=jnp.float32) * 0.1

    keys = iter(jax.random.split(key, 256))

    params = {"embedding": nrm(next(keys), (vocab_size, E))}

    lstm = []
    for layer in range(config["num_rnn_layers"]):
        in_dim = E if layer == 0 else H * ND
        layer_p = {}
        for dname in (["fwd", "bwd"] if config["bidirectional"] else ["fwd"]):
            w_ih = nrm(next(keys), (in_dim, 4 * H))          # gate order i,f,g,o
            w_hh = nrm(next(keys), (H, 4 * H))
            # PyTorch has separate b_ih and b_hh; their sum is equivalent.
            b = nrm(next(keys), (1, 4 * H)) + nrm(next(keys), (1, 4 * H))
            layer_p[dname] = (w_ih, w_hh, b)
        lstm.append(layer_p)
    params["lstm"] = lstm

    mlp = []
    for li in range(config["num_linear_layers"]):
        in_dim = H * ND if li == 0 else H
        mlp.append(nrm(next(keys), (in_dim, H)))   # W
        mlp.append(nrm(next(keys), (1, H)))        # b
    mlp.append(nrm(next(keys), (1, H)))            # final W stored as a row
    mlp.append(nrm(next(keys), (1, 1)))            # final b
    params["mlp"] = mlp
    return params


if __name__ == "__main__":
    config = {
        "embedding_dim": 32,
        "hidden_dim": 32,      # production: prefer H % 128 == 0 (lane-dense gates)
        "num_rnn_layers": 1,
        "bidirectional": True,
        "dropout": 0.0,
        "num_linear_layers": 1,
    }
    vocab_size = 64
    B, T = 2, 8

    key = jax.random.PRNGKey(0)
    k_tok, k_par = jax.random.split(key)

    tokens = jax.random.randint(k_tok, (B, T), 0, vocab_size, dtype=jnp.int32)
    params = init_params(k_par, config, vocab_size)

    fwd = jax.jit(functools.partial(amr_baseline_forward, config=config))
    yt = fwd(tokens, params)
    jax.block_until_ready(yt)

    assert yt.shape == (B, T), yt.shape
    assert bool(jnp.all(jnp.isfinite(yt)))
    assert bool(jnp.all((yt >= 0.0) & (yt <= 1.0)))
    print("KERNEL_OK")
</pallas_src>

<mosaic_0001>
module attributes {stable_mosaic.version = 11 : i64} {
  func.func @kernel(%arg0: i32, %arg1: memref<64x1xi32, #tpu.memory_space<vmem>>, %arg2: memref<64x32xbf16, #tpu.memory_space<vmem>>, %arg3: memref<32x128xbf16, #tpu.memory_space<vmem>>, %arg4: memref<32x128xbf16, #tpu.memory_space<vmem>>, %arg5: memref<1x128xf32, #tpu.memory_space<vmem>>, %arg6: memref<32x128xbf16, #tpu.memory_space<vmem>>, %arg7: memref<32x128xbf16, #tpu.memory_space<vmem>>, %arg8: memref<1x128xf32, #tpu.memory_space<vmem>>, %arg9: memref<64x32xbf16, #tpu.memory_space<vmem>>, %arg10: memref<1x32xf32, #tpu.memory_space<vmem>>, %arg11: memref<1x32xf32, #tpu.memory_space<vmem>>, %arg12: memref<1x1xf32, #tpu.memory_space<vmem>>, %arg13: memref<1x8x8xf32, #tpu.memory_space<vmem>>) attributes {dimension_semantics = [#tpu.dimension_semantics<parallel>], iteration_bounds = array<i64: 1>, scalar_prefetch = 0 : i64, scratch_operands = 0 : i64, tpu.core_type = #tpu.core_type<tc>, window_params = [{transform_indices = @transform_0, window_bounds = array<i64: 64, 1>}, {pipeline_mode = #tpu.pipeline_mode<synchronous>, transform_indices = @transform_1, window_bounds = array<i64: 64, 32>}, {pipeline_mode = #tpu.pipeline_mode<synchronous>, transform_indices = @transform_2, window_bounds = array<i64: 32, 128>}, {pipeline_mode = #tpu.pipeline_mode<synchronous>, transform_indices = @transform_3, window_bounds = array<i64: 32, 128>}, {pipeline_mode = #tpu.pipeline_mode<synchronous>, transform_indices = @transform_4, window_bounds = array<i64: 1, 128>}, {pipeline_mode = #tpu.pipeline_mode<synchronous>, transform_indices = @transform_5, window_bounds = array<i64: 32, 128>}, {pipeline_mode = #tpu.pipeline_mode<synchronous>, transform_indices = @transform_6, window_bounds = array<i64: 32, 128>}, {pipeline_mode = #tpu.pipeline_mode<synchronous>, transform_indices = @transform_7, window_bounds = array<i64: 1, 128>}, {pipeline_mode = #tpu.pipeline_mode<synchronous>, transform_indices = @transform_8, window_bounds = array<i64: 64, 32>}, {pipeline_mode = #tpu.pipeline_mode<synchronous>, transform_indices = @transform_9, window_bounds = array<i64: 1, 32>}, {pipeline_mode = #tpu.pipeline_mode<synchronous>, transform_indices = @transform_10, window_bounds = array<i64: 1, 32>}, {pipeline_mode = #tpu.pipeline_mode<synchronous>, transform_indices = @transform_11, window_bounds = array<i64: 1, 1>}, {transform_indices = @transform_12, window_bounds = array<i64: 1, 8, 8>}]} {
    %c0 = arith.constant 0 : index
    %c0_0 = arith.constant 0 : index
    %0 = vector.load %arg1[%c0, %c0_0] : memref<64x1xi32, #tpu.memory_space<vmem>>, vector<64x1xi32>
    %1 = tpu.iota {dimensions = array<i32: 1>} : vector<64x64xi32>
    %2 = vector.broadcast %0 : vector<64x1xi32> to vector<64x64xi32>
    %3 = arith.cmpi eq, %2, %1 : vector<64x64xi32>
    %4 = arith.extui %3 : vector<64x64xi1> to vector<64x64xi32>
    %5 = arith.sitofp %4 : vector<64x64xi32> to vector<64x64xf32>
    %6 = arith.truncf %5 : vector<64x64xf32> to vector<64x64xbf16>
    %c0_1 = arith.constant 0 : index
    %c0_2 = arith.constant 0 : index
    %7 = vector.load %arg2[%c0_1, %c0_2] : memref<64x32xbf16, #tpu.memory_space<vmem>>, vector<64x32xbf16>
    %cst = arith.constant dense<0.000000e+00> : vector<64x32xf32>
    %8 = tpu.matmul %6, %7, %cst {dimension_numbers = #tpu.dot_dimension_numbers<[1], [0], [0], [1], [0, 0, 1, 1], [], []>} : vector<64x64xbf16>, vector<64x32xbf16>, vector<64x32xf32> -> vector<64x32xf32>
    %c0_3 = arith.constant 0 : index
    %c0_4 = arith.constant 0 : index
    %9 = vector.load %arg3[%c0_3, %c0_4] : memref<32x128xbf16, #tpu.memory_space<vmem>>, vector<32x128xbf16>
    %10 = arith.truncf %8 : vector<64x32xf32> to vector<64x32xbf16>
    %cst_5 = arith.constant dense<0.000000e+00> : vector<64x128xf32>
    %11 = tpu.matmul %10, %9, %cst_5 {dimension_numbers = #tpu.dot_dimension_numbers<[1], [0], [0], [1], [0, 0, 1, 1], [], []>} : vector<64x32xbf16>, vector<32x128xbf16>, vector<64x128xf32> -> vector<64x128xf32>
    %c0_6 = arith.constant 0 : index
    %c0_7 = arith.constant 0 : index
    %12 = vector.load %arg5[%c0_6, %c0_7] : memref<1x128xf32, #tpu.memory_space<vmem>>, vector<1x128xf32>
    %13 = vector.broadcast %12 : vector<1x128xf32> to vector<64x128xf32>
    %14 = arith.addf %11, %13 : vector<64x128xf32>
    %c0_8 = arith.constant 0 : index
    %c0_9 = arith.constant 0 : index
    %15 = vector.load %arg4[%c0_8, %c0_9] : memref<32x128xbf16, #tpu.memory_space<vmem>>, vector<32x128xbf16>
    %c0_10 = arith.constant 0 : index
    %c0_11 = arith.constant 0 : index
    %16 = vector.load %arg6[%c0_10, %c0_11] : memref<32x128xbf16, #tpu.memory_space<vmem>>, vector<32x128xbf16>
    %17 = arith.truncf %8 : vector<64x32xf32> to vector<64x32xbf16>
    %cst_12 = arith.constant dense<0.000000e+00> : vector<64x128xf32>
    %18 = tpu.matmul %17, %16, %cst_12 {dimension_numbers = #tpu.dot_dimension_numbers<[1], [0], [0], [1], [0, 0, 1, 1], [], []>} : vector<64x32xbf16>, vector<32x128xbf16>, vector<64x128xf32> -> vector<64x128xf32>
    %c0_13 = arith.constant 0 : index
    %c0_14 = arith.constant 0 : index
    %19 = vector.load %arg8[%c0_13, %c0_14] : memref<1x128xf32, #tpu.memory_space<vmem>>, vector<1x128xf32>
    %20 = vector.broadcast %19 : vector<1x128xf32> to vector<64x128xf32>
    %21 = arith.addf %18, %20 : vector<64x128xf32>
    %c0_15 = arith.constant 0 : index
    %c0_16 = arith.constant 0 : index
    %22 = vector.load %arg7[%c0_15, %c0_16] : memref<32x128xbf16, #tpu.memory_space<vmem>>, vector<32x128xbf16>
    %cst_17 = arith.constant 0.000000e+00 : f32
    %23 = vector.broadcast %cst_17 : f32 to vector<8x32xf32>
    %cst_18 = arith.constant 0.000000e+00 : f32
    %24 = vector.broadcast %cst_18 : f32 to vector<8x32xf32>
    %cst_19 = arith.constant 0.000000e+00 : f32
    %25 = vector.broadcast %cst_19 : f32 to vector<8x32xf32>
    %cst_20 = arith.constant 0.000000e+00 : f32
    %26 = vector.broadcast %cst_20 : f32 to vector<8x32xf32>
    %27 = vector.extract_strided_slice %14 {offsets = [0, 0], sizes = [8, 128], strides = [1, 1]} : vector<64x128xf32> to vector<8x128xf32>
    %28 = arith.truncf %23 : vector<8x32xf32> to vector<8x32xbf16>
    %cst_21 = arith.constant dense<0.000000e+00> : vector<8x128xf32>
    %29 = tpu.matmul %28, %15, %cst_21 {dimension_numbers = #tpu.dot_dimension_numbers<[1], [0], [0], [1], [0, 0, 1, 1], [], []>} : vector<8x32xbf16>, vector<32x128xbf16>, vector<8x128xf32> -> vector<8x128xf32>
    %30 = arith.addf %27, %29 : vector<8x128xf32>
    %31 = vector.extract_strided_slice %30 {offsets = [0, 0], sizes = [8, 96], strides = [1, 1]} : vector<8x128xf32> to vector<8x96xf32>
    %32 = arith.negf %31 : vector<8x96xf32>
    %33 = math.exp %32 : vector<8x96xf32>
    %cst_22 = arith.constant 1.000000e+00 : f32
    %34 = vector.broadcast %cst_22 : f32 to vector<8x96xf32>
    %35 = arith.addf %34, %33 : vector<8x96xf32>
    %36 = arith.divf %34, %35 : vector<8x96xf32>
    %37 = vector.extract_strided_slice %30 {offsets = [0, 96], sizes = [8, 32], strides = [1, 1]} : vector<8x128xf32> to vector<8x32xf32>
    %38 = math.tanh %37 : vector<8x32xf32>
    %39 = vector.extract_strided_slice %36 {offsets = [0, 32], sizes = [8, 32], strides = [1, 1]} : vector<8x96xf32> to vector<8x32xf32>
    %40 = arith.mulf %39, %24 : vector<8x32xf32>
    %41 = vector.extract_strided_slice %36 {offsets = [0, 0], sizes = [8, 32], strides = [1, 1]} : vector<8x96xf32> to vector<8x32xf32>
    %42 = arith.mulf %41, %38 : vector<8x32xf32>
    %43 = arith.addf %40, %42 : vector<8x32xf32>
    %44 = vector.extract_strided_slice %36 {offsets = [0, 64], sizes = [8, 32], strides = [1, 1]} : vector<8x96xf32> to vector<8x32xf32>
    %45 = math.tanh %43 : vector<8x32xf32>
    %46 = arith.mulf %44, %45 : vector<8x32xf32>
    %47 = vector.extract_strided_slice %21 {offsets = [56, 0], sizes = [8, 128], strides = [1, 1]} : vector<64x128xf32> to vector<8x128xf32>
    %48 = arith.truncf %25 : vector<8x32xf32> to vector<8x32xbf16>
    %cst_23 = arith.constant dense<0.000000e+00> : vector<8x128xf32>
    %49 = tpu.matmul %48, %22, %cst_23 {dimension_numbers = #tpu.dot_dimension_numbers<[1], [0], [0], [1], [0, 0, 1, 1], [], []>} : vector<8x32xbf16>, vector<32x128xbf16>, vector<8x128xf32> -> vector<8x128xf32>
    %50 = arith.addf %47, %49 : vector<8x128xf32>
    %51 = vector.extract_strided_slice %50 {offsets = [0, 0], sizes = [8, 96], strides = [1, 1]} : vector<8x128xf32> to vector<8x96xf32>
    %52 = arith.negf %51 : vector<8x96xf32>
    %53 = math.exp %52 : vector<8x96xf32>
    %cst_24 = arith.constant 1.000000e+00 : f32
    %54 = vector.broadcast %cst_24 : f32 to vector<8x96xf32>
    %55 = arith.addf %54, %53 : vector<8x96xf32>
    %56 = arith.divf %54, %55 : vector<8x96xf32>
    %57 = vector.extract_strided_slice %50 {offsets = [0, 96], sizes = [8, 32], strides = [1, 1]} : vector<8x128xf32> to vector<8x32xf32>
    %58 = math.tanh %57 : vector<8x32xf32>
    %59 = vector.extract_strided_slice %56 {offsets = [0, 32], sizes = [8, 32], strides = [1, 1]} : vector<8x96xf32> to vector<8x32xf32>
    %60 = arith.mulf %59, %26 : vector<8x32xf32>
    %61 = vector.extract_strided_slice %56 {offsets = [0, 0], sizes = [8, 32], strides = [1, 1]} : vector<8x96xf32> to vector<8x32xf32>
    %62 = arith.mulf %61, %58 : vector<8x32xf32>
    %63 = arith.addf %60, %62 : vector<8x32xf32>
    %64 = vector.extract_strided_slice %56 {offsets = [0, 64], sizes = [8, 32], strides = [1, 1]} : vector<8x96xf32> to vector<8x32xf32>
    %65 = math.tanh %63 : vector<8x32xf32>
    %66 = arith.mulf %64, %65 : vector<8x32xf32>
    %67 = vector.extract_strided_slice %14 {offsets = [8, 0], sizes = [8, 128], strides = [1, 1]} : vector<64x128xf32> to vector<8x128xf32>
    %68 = arith.truncf %46 : vector<8x32xf32> to vector<8x32xbf16>
    %cst_25 = arith.constant dense<0.000000e+00> : vector<8x128xf32>
    %69 = tpu.matmul %68, %15, %cst_25 {dimension_numbers = #tpu.dot_dimension_numbers<[1], [0], [0], [1], [0, 0, 1, 1], [], []>} : vector<8x32xbf16>, vector<32x128xbf16>, vector<8x128xf32> -> vector<8x128xf32>
    %70 = arith.addf %67, %69 : vector<8x128xf32>
    %71 = vector.extract_strided_slice %70 {offsets = [0, 0], sizes = [8, 96], strides = [1, 1]} : vector<8x128xf32> to vector<8x96xf32>
    %72 = arith.negf %71 : vector<8x96xf32>
    %73 = math.exp %72 : vector<8x96xf32>
    %cst_26 = arith.constant 1.000000e+00 : f32
    %74 = vector.broadcast %cst_26 : f32 to vector<8x96xf32>
    %75 = arith.addf %74, %73 : vector<8x96xf32>
    %76 = arith.divf %74, %75 : vector<8x96xf32>
    %77 = vector.extract_strided_slice %70 {offsets = [0, 96], sizes = [8, 32], strides = [1, 1]} : vector<8x128xf32> to vector<8x32xf32>
    %78 = math.tanh %77 : vector<8x32xf32>
    %79 = vector.extract_strided_slice %76 {offsets = [0, 32], sizes = [8, 32], strides = [1, 1]} : vector<8x96xf32> to vector<8x32xf32>
    %80 = arith.mulf %79, %43 : vector<8x32xf32>
    %81 = vector.extract_strided_slice %76 {offsets = [0, 0], sizes = [8, 32], strides = [1, 1]} : vector<8x96xf32> to vector<8x32xf32>
    %82 = arith.mulf %81, %78 : vector<8x32xf32>
    %83 = arith.addf %80, %82 : vector<8x32xf32>
    %84 = vector.extract_strided_slice %76 {offsets = [0, 64], sizes = [8, 32], strides = [1, 1]} : vector<8x96xf32> to vector<8x32xf32>
    %85 = math.tanh %83 : vector<8x32xf32>
    %86 = arith.mulf %84, %85 : vector<8x32xf32>
    %87 = vector.extract_strided_slice %21 {offsets = [48, 0], sizes = [8, 128], strides = [1, 1]} : vector<64x128xf32> to vector<8x128xf32>
    %88 = arith.truncf %66 : vector<8x32xf32> to vector<8x32xbf16>
    %cst_27 = arith.constant dense<0.000000e+00> : vector<8x128xf32>
    %89 = tpu.matmul %88, %22, %cst_27 {dimension_numbers = #tpu.dot_dimension_numbers<[1], [0], [0], [1], [0, 0, 1, 1], [], []>} : vector<8x32xbf16>, vector<32x128xbf16>, vector<8x128xf32> -> vector<8x128xf32>
    %90 = arith.addf %87, %89 : vector<8x128xf32>
    %91 = vector.extract_strided_slice %90 {offsets = [0, 0], sizes = [8, 96], strides = [1, 1]} : vector<8x128xf32> to vector<8x96xf32>
    %92 = arith.negf %91 : vector<8x96xf32>
    %93 = math.exp %92 : vector<8x96xf32>
    %cst_28 = arith.constant 1.000000e+00 : f32
    %94 = vector.broadcast %cst_28 : f32 to vector<8x96xf32>
    %95 = arith.addf %94, %93 : vector<8x96xf32>
    %96 = arith.divf %94, %95 : vector<8x96xf32>
    %97 = vector.extract_strided_slice %90 {offsets = [0, 96], sizes = [8, 32], strides = [1, 1]} : vector<8x128xf32> to vector<8x32xf32>
    %98 = math.tanh %97 : vector<8x32xf32>
    %99 = vector.extract_strided_slice %96 {offsets = [0, 32], sizes = [8, 32], strides = [1, 1]} : vector<8x96xf32> to vector<8x32xf32>
    %100 = arith.mulf %99, %63 : vector<8x32xf32>
    %101 = vector.extract_strided_slice %96 {offsets = [0, 0], sizes = [8, 32], strides = [1, 1]} : vector<8x96xf32> to vector<8x32xf32>
    %102 = arith.mulf %101, %98 : vector<8x32xf32>
    %103 = arith.addf %100, %102 : vector<8x32xf32>
    %104 = vector.extract_strided_slice %96 {offsets = [0, 64], sizes = [8, 32], strides = [1, 1]} : vector<8x96xf32> to vector<8x32xf32>
    %105 = math.tanh %103 : vector<8x32xf32>
    %106 = arith.mulf %104, %105 : vector<8x32xf32>
    %107 = vector.extract_strided_slice %14 {offsets = [16, 0], sizes = [8, 128], strides = [1, 1]} : vector<64x128xf32> to vector<8x128xf32>
    %108 = arith.truncf %86 : vector<8x32xf32> to vector<8x32xbf16>
    %cst_29 = arith.constant dense<0.000000e+00> : vector<8x128xf32>
    %109 = tpu.matmul %108, %15, %cst_29 {dimension_numbers = #tpu.dot_dimension_numbers<[1], [0], [0], [1], [0, 0, 1, 1], [], []>} : vector<8x32xbf16>, vector<32x128xbf16>, vector<8x128xf32> -> vector<8x128xf32>
    %110 = arith.addf %107, %109 : vector<8x128xf32>
    %111 = vector.extract_strided_slice %110 {offsets = [0, 0], sizes = [8, 96], strides = [1, 1]} : vector<8x128xf32> to vector<8x96xf32>
    %112 = arith.negf %111 : vector<8x96xf32>
    %113 = math.exp %112 : vector<8x96xf32>
    %cst_30 = arith.constant 1.000000e+00 : f32
    %114 = vector.broadcast %cst_30 : f32 to vector<8x96xf32>
    %115 = arith.addf %114, %113 : vector<8x96xf32>
    %116 = arith.divf %114, %115 : vector<8x96xf32>
    %117 = vector.extract_strided_slice %110 {offsets = [0, 96], sizes = [8, 32], strides = [1, 1]} : vector<8x128xf32> to vector<8x32xf32>
    %118 = math.tanh %117 : vector<8x32xf32>
    %119 = vector.extract_strided_slice %116 {offsets = [0, 32], sizes = [8, 32], strides = [1, 1]} : vector<8x96xf32> to vector<8x32xf32>
    %120 = arith.mulf %119, %83 : vector<8x32xf32>
    %121 = vector.extract_strided_slice %116 {offsets = [0, 0], sizes = [8, 32], strides = [1, 1]} : vector<8x96xf32> to vector<8x32xf32>
    %122 = arith.mulf %121, %118 : vector<8x32xf32>
    %123 = arith.addf %120, %122 : vector<8x32xf32>
    %124 = vector.extract_strided_slice %116 {offsets = [0, 64], sizes = [8, 32], strides = [1, 1]} : vector<8x96xf32> to vector<8x32xf32>
    %125 = math.tanh %123 : vector<8x32xf32>
    %126 = arith.mulf %124, %125 : vector<8x32xf32>
    %127 = vector.extract_strided_slice %21 {offsets = [40, 0], sizes = [8, 128], strides = [1, 1]} : vector<64x128xf32> to vector<8x128xf32>
    %128 = arith.truncf %106 : vector<8x32xf32> to vector<8x32xbf16>
    %cst_31 = arith.constant dense<0.000000e+00> : vector<8x128xf32>
    %129 = tpu.matmul %128, %22, %cst_31 {dimension_numbers = #tpu.dot_dimension_numbers<[1], [0], [0], [1], [0, 0, 1, 1], [], []>} : vector<8x32xbf16>, vector<32x128xbf16>, vector<8x128xf32> -> vector<8x128xf32>
    %130 = arith.addf %127, %129 : vector<8x128xf32>
    %131 = vector.extract_strided_slice %130 {offsets = [0, 0], sizes = [8, 96], strides = [1, 1]} : vector<8x128xf32> to vector<8x96xf32>
    %132 = arith.negf %131 : vector<8x96xf32>
    %133 = math.exp %132 : vector<8x96xf32>
    %cst_32 = arith.constant 1.000000e+00 : f32
    %134 = vector.broadcast %cst_32 : f32 to vector<8x96xf32>
    %135 = arith.addf %134, %133 : vector<8x96xf32>
    %136 = arith.divf %134, %135 : vector<8x96xf32>
    %137 = vector.extract_strided_slice %130 {offsets = [0, 96], sizes = [8, 32], strides = [1, 1]} : vector<8x128xf32> to vector<8x32xf32>
    %138 = math.tanh %137 : vector<8x32xf32>
    %139 = vector.extract_strided_slice %136 {offsets = [0, 32], sizes = [8, 32], strides = [1, 1]} : vector<8x96xf32> to vector<8x32xf32>
    %140 = arith.mulf %139, %103 : vector<8x32xf32>
    %141 = vector.extract_strided_slice %136 {offsets = [0, 0], sizes = [8, 32], strides = [1, 1]} : vector<8x96xf32> to vector<8x32xf32>
    %142 = arith.mulf %141, %138 : vector<8x32xf32>
    %143 = arith.addf %140, %142 : vector<8x32xf32>
    %144 = vector.extract_strided_slice %136 {offsets = [0, 64], sizes = [8, 32], strides = [1, 1]} : vector<8x96xf32> to vector<8x32xf32>
    %145 = math.tanh %143 : vector<8x32xf32>
    %146 = arith.mulf %144, %145 : vector<8x32xf32>
    %147 = vector.extract_strided_slice %14 {offsets = [24, 0], sizes = [8, 128], strides = [1, 1]} : vector<64x128xf32> to vector<8x128xf32>
    %148 = arith.truncf %126 : vector<8x32xf32> to vector<8x32xbf16>
    %cst_33 = arith.constant dense<0.000000e+00> : vector<8x128xf32>
    %149 = tpu.matmul %148, %15, %cst_33 {dimension_numbers = #tpu.dot_dimension_numbers<[1], [0], [0], [1], [0, 0, 1, 1], [], []>} : vector<8x32xbf16>, vector<32x128xbf16>, vector<8x128xf32> -> vector<8x128xf32>
    %150 = arith.addf %147, %149 : vector<8x128xf32>
    %151 = vector.extract_strided_slice %150 {offsets = [0, 0], sizes = [8, 96], strides = [1, 1]} : vector<8x128xf32> to vector<8x96xf32>
    %152 = arith.negf %151 : vector<8x96xf32>
    %153 = math.exp %152 : vector<8x96xf32>
    %cst_34 = arith.constant 1.000000e+00 : f32
    %154 = vector.broadcast %cst_34 : f32 to vector<8x96xf32>
    %155 = arith.addf %154, %153 : vector<8x96xf32>
    %156 = arith.divf %154, %155 : vector<8x96xf32>
    %157 = vector.extract_strided_slice %150 {offsets = [0, 96], sizes = [8, 32], strides = [1, 1]} : vector<8x128xf32> to vector<8x32xf32>
    %158 = math.tanh %157 : vector<8x32xf32>
    %159 = vector.extract_strided_slice %156 {offsets = [0, 32], sizes = [8, 32], strides = [1, 1]} : vector<8x96xf32> to vector<8x32xf32>
    %160 = arith.mulf %159, %123 : vector<8x32xf32>
    %161 = vector.extract_strided_slice %156 {offsets = [0, 0], sizes = [8, 32], strides = [1, 1]} : vector<8x96xf32> to vector<8x32xf32>
    %162 = arith.mulf %161, %158 : vector<8x32xf32>
    %163 = arith.addf %160, %162 : vector<8x32xf32>
    %164 = vector.extract_strided_slice %156 {offsets = [0, 64], sizes = [8, 32], strides = [1, 1]} : vector<8x96xf32> to vector<8x32xf32>
    %165 = math.tanh %163 : vector<8x32xf32>
    %166 = arith.mulf %164, %165 : vector<8x32xf32>
    %167 = vector.extract_strided_slice %21 {offsets = [32, 0], sizes = [8, 128], strides = [1, 1]} : vector<64x128xf32> to vector<8x128xf32>
    %168 = arith.truncf %146 : vector<8x32xf32> to vector<8x32xbf16>
    %cst_35 = arith.constant dense<0.000000e+00> : vector<8x128xf32>
    %169 = tpu.matmul %168, %22, %cst_35 {dimension_numbers = #tpu.dot_dimension_numbers<[1], [0], [0], [1], [0, 0, 1, 1], [], []>} : vector<8x32xbf16>, vector<32x128xbf16>, vector<8x128xf32> -> vector<8x128xf32>
    %170 = arith.addf %167, %169 : vector<8x128xf32>
    %171 = vector.extract_strided_slice %170 {offsets = [0, 0], sizes = [8, 96], strides = [1, 1]} : vector<8x128xf32> to vector<8x96xf32>
    %172 = arith.negf %171 : vector<8x96xf32>
    %173 = math.exp %172 : vector<8x96xf32>
    %cst_36 = arith.constant 1.000000e+00 : f32
    %174 = vector.broadcast %cst_36 : f32 to vector<8x96xf32>
    %175 = arith.addf %174, %173 : vector<8x96xf32>
    %176 = arith.divf %174, %175 : vector<8x96xf32>
    %177 = vector.extract_strided_slice %170 {offsets = [0, 96], sizes = [8, 32], strides = [1, 1]} : vector<8x128xf32> to vector<8x32xf32>
    %178 = math.tanh %177 : vector<8x32xf32>
    %179 = vector.extract_strided_slice %176 {offsets = [0, 32], sizes = [8, 32], strides = [1, 1]} : vector<8x96xf32> to vector<8x32xf32>
    %180 = arith.mulf %179, %143 : vector<8x32xf32>
    %181 = vector.extract_strided_slice %176 {offsets = [0, 0], sizes = [8, 32], strides = [1, 1]} : vector<8x96xf32> to vector<8x32xf32>
    %182 = arith.mulf %181, %178 : vector<8x32xf32>
    %183 = arith.addf %180, %182 : vector<8x32xf32>
    %184 = vector.extract_strided_slice %176 {offsets = [0, 64], sizes = [8, 32], strides = [1, 1]} : vector<8x96xf32> to vector<8x32xf32>
    %185 = math.tanh %183 : vector<8x32xf32>
    %186 = arith.mulf %184, %185 : vector<8x32xf32>
    %187 = vector.extract_strided_slice %14 {offsets = [32, 0], sizes = [8, 128], strides = [1, 1]} : vector<64x128xf32> to vector<8x128xf32>
    %188 = arith.truncf %166 : vector<8x32xf32> to vector<8x32xbf16>
    %cst_37 = arith.constant dense<0.000000e+00> : vector<8x128xf32>
    %189 = tpu.matmul %188, %15, %cst_37 {dimension_numbers = #tpu.dot_dimension_numbers<[1], [0], [0], [1], [0, 0, 1, 1], [], []>} : vector<8x32xbf16>, vector<32x128xbf16>, vector<8x128xf32> -> vector<8x128xf32>
    %190 = arith.addf %187, %189 : vector<8x128xf32>
    %191 = vector.extract_strided_slice %190 {offsets = [0, 0], sizes = [8, 96], strides = [1, 1]} : vector<8x128xf32> to vector<8x96xf32>
    %192 = arith.negf %191 : vector<8x96xf32>
    %193 = math.exp %192 : vector<8x96xf32>
    %cst_38 = arith.constant 1.000000e+00 : f32
    %194 = vector.broadcast %cst_38 : f32 to vector<8x96xf32>
    %195 = arith.addf %194, %193 : vector<8x96xf32>
    %196 = arith.divf %194, %195 : vector<8x96xf32>
    %197 = vector.extract_strided_slice %190 {offsets = [0, 96], sizes = [8, 32], strides = [1, 1]} : vector<8x128xf32> to vector<8x32xf32>
    %198 = math.tanh %197 : vector<8x32xf32>
    %199 = vector.extract_strided_slice %196 {offsets = [0, 32], sizes = [8, 32], strides = [1, 1]} : vector<8x96xf32> to vector<8x32xf32>
    %200 = arith.mulf %199, %163 : vector<8x32xf32>
    %201 = vector.extract_strided_slice %196 {offsets = [0, 0], sizes = [8, 32], strides = [1, 1]} : vector<8x96xf32> to vector<8x32xf32>
    %202 = arith.mulf %201, %198 : vector<8x32xf32>
    %203 = arith.addf %200, %202 : vector<8x32xf32>
    %204 = vector.extract_strided_slice %196 {offsets = [0, 64], sizes = [8, 32], strides = [1, 1]} : vector<8x96xf32> to vector<8x32xf32>
    %205 = math.tanh %203 : vector<8x32xf32>
    %206 = arith.mulf %204, %205 : vector<8x32xf32>
    %207 = vector.extract_strided_slice %21 {offsets = [24, 0], sizes = [8, 128], strides = [1, 1]} : vector<64x128xf32> to vector<8x128xf32>
    %208 = arith.truncf %186 : vector<8x32xf32> to vector<8x32xbf16>
    %cst_39 = arith.constant dense<0.000000e+00> : vector<8x128xf32>
    %209 = tpu.matmul %208, %22, %cst_39 {dimension_numbers = #tpu.dot_dimension_numbers<[1], [0], [0], [1], [0, 0, 1, 1], [], []>} : vector<8x32xbf16>, vector<32x128xbf16>, vector<8x128xf32> -> vector<8x128xf32>
    %210 = arith.addf %207, %209 : vector<8x128xf32>
    %211 = vector.extract_strided_slice %210 {offsets = [0, 0], sizes = [8, 96], strides = [1, 1]} : vector<8x128xf32> to vector<8x96xf32>
    %212 = arith.negf %211 : vector<8x96xf32>
    %213 = math.exp %212 : vector<8x96xf32>
    %cst_40 = arith.constant 1.000000e+00 : f32
    %214 = vector.broadcast %cst_40 : f32 to vector<8x96xf32>
    %215 = arith.addf %214, %213 : vector<8x96xf32>
    %216 = arith.divf %214, %215 : vector<8x96xf32>
    %217 = vector.extract_strided_slice %210 {offsets = [0, 96], sizes = [8, 32], strides = [1, 1]} : vector<8x128xf32> to vector<8x32xf32>
    %218 = math.tanh %217 : vector<8x32xf32>
    %219 = vector.extract_strided_slice %216 {offsets = [0, 32], sizes = [8, 32], strides = [1, 1]} : vector<8x96xf32> to vector<8x32xf32>
    %220 = arith.mulf %219, %183 : vector<8x32xf32>
    %221 = vector.extract_strided_slice %216 {offsets = [0, 0], sizes = [8, 32], strides = [1, 1]} : vector<8x96xf32> to vector<8x32xf32>
    %222 = arith.mulf %221, %218 : vector<8x32xf32>
    %223 = arith.addf %220, %222 : vector<8x32xf32>
    %224 = vector.extract_strided_slice %216 {offsets = [0, 64], sizes = [8, 32], strides = [1, 1]} : vector<8x96xf32> to vector<8x32xf32>
    %225 = math.tanh %223 : vector<8x32xf32>
    %226 = arith.mulf %224, %225 : vector<8x32xf32>
    %227 = vector.extract_strided_slice %14 {offsets = [40, 0], sizes = [8, 128], strides = [1, 1]} : vector<64x128xf32> to vector<8x128xf32>
    %228 = arith.truncf %206 : vector<8x32xf32> to vector<8x32xbf16>
    %cst_41 = arith.constant dense<0.000000e+00> : vector<8x128xf32>
    %229 = tpu.matmul %228, %15, %cst_41 {dimension_numbers = #tpu.dot_dimension_numbers<[1], [0], [0], [1], [0, 0, 1, 1], [], []>} : vector<8x32xbf16>, vector<32x128xbf16>, vector<8x128xf32> -> vector<8x128xf32>
    %230 = arith.addf %227, %229 : vector<8x128xf32>
    %231 = vector.extract_strided_slice %230 {offsets = [0, 0], sizes = [8, 96], strides = [1, 1]} : vector<8x128xf32> to vector<8x96xf32>
    %232 = arith.negf %231 : vector<8x96xf32>
    %233 = math.exp %232 : vector<8x96xf32>
    %cst_42 = arith.constant 1.000000e+00 : f32
    %234 = vector.broadcast %cst_42 : f32 to vector<8x96xf32>
    %235 = arith.addf %234, %233 : vector<8x96xf32>
    %236 = arith.divf %234, %235 : vector<8x96xf32>
    %237 = vector.extract_strided_slice %230 {offsets = [0, 96], sizes = [8, 32], strides = [1, 1]} : vector<8x128xf32> to vector<8x32xf32>
    %238 = math.tanh %237 : vector<8x32xf32>
    %239 = vector.extract_strided_slice %236 {offsets = [0, 32], sizes = [8, 32], strides = [1, 1]} : vector<8x96xf32> to vector<8x32xf32>
    %240 = arith.mulf %239, %203 : vector<8x32xf32>
    %241 = vector.extract_strided_slice %236 {offsets = [0, 0], sizes = [8, 32], strides = [1, 1]} : vector<8x96xf32> to vector<8x32xf32>
    %242 = arith.mulf %241, %238 : vector<8x32xf32>
    %243 = arith.addf %240, %242 : vector<8x32xf32>
    %244 = vector.extract_strided_slice %236 {offsets = [0, 64], sizes = [8, 32], strides = [1, 1]} : vector<8x96xf32> to vector<8x32xf32>
    %245 = math.tanh %243 : vector<8x32xf32>
    %246 = arith.mulf %244, %245 : vector<8x32xf32>
    %247 = vector.extract_strided_slice %21 {offsets = [16, 0], sizes = [8, 128], strides = [1, 1]} : vector<64x128xf32> to vector<8x128xf32>
    %248 = arith.truncf %226 : vector<8x32xf32> to vector<8x32xbf16>
    %cst_43 = arith.constant dense<0.000000e+00> : vector<8x128xf32>
    %249 = tpu.matmul %248, %22, %cst_43 {dimension_numbers = #tpu.dot_dimension_numbers<[1], [0], [0], [1], [0, 0, 1, 1], [], []>} : vector<8x32xbf16>, vector<32x128xbf16>, vector<8x128xf32> -> vector<8x128xf32>
    %250 = arith.addf %247, %249 : vector<8x128xf32>
    %251 = vector.extract_strided_slice %250 {offsets = [0, 0], sizes = [8, 96], strides = [1, 1]} : vector<8x128xf32> to vector<8x96xf32>
    %252 = arith.negf %251 : vector<8x96xf32>
    %253 = math.exp %252 : vector<8x96xf32>
    %cst_44 = arith.constant 1.000000e+00 : f32
    %254 = vector.broadcast %cst_44 : f32 to vector<8x96xf32>
    %255 = arith.addf %254, %253 : vector<8x96xf32>
    %256 = arith.divf %254, %255 : vector<8x96xf32>
    %257 = vector.extract_strided_slice %250 {offsets = [0, 96], sizes = [8, 32], strides = [1, 1]} : vector<8x128xf32> to vector<8x32xf32>
    %258 = math.tanh %257 : vector<8x32xf32>
    %259 = vector.extract_strided_slice %256 {offsets = [0, 32], sizes = [8, 32], strides = [1, 1]} : vector<8x96xf32> to vector<8x32xf32>
    %260 = arith.mulf %259, %223 : vector<8x32xf32>
    %261 = vector.extract_strided_slice %256 {offsets = [0, 0], sizes = [8, 32], strides = [1, 1]} : vector<8x96xf32> to vector<8x32xf32>
    %262 = arith.mulf %261, %258 : vector<8x32xf32>
    %263 = arith.addf %260, %262 : vector<8x32xf32>
    %264 = vector.extract_strided_slice %256 {offsets = [0, 64], sizes = [8, 32], strides = [1, 1]} : vector<8x96xf32> to vector<8x32xf32>
    %265 = math.tanh %263 : vector<8x32xf32>
    %266 = arith.mulf %264, %265 : vector<8x32xf32>
    %267 = vector.extract_strided_slice %14 {offsets = [48, 0], sizes = [8, 128], strides = [1, 1]} : vector<64x128xf32> to vector<8x128xf32>
    %268 = arith.truncf %246 : vector<8x32xf32> to vector<8x32xbf16>
    %cst_45 = arith.constant dense<0.000000e+00> : vector<8x128xf32>
    %269 = tpu.matmul %268, %15, %cst_45 {dimension_numbers = #tpu.dot_dimension_numbers<[1], [0], [0], [1], [0, 0, 1, 1], [], []>} : vector<8x32xbf16>, vector<32x128xbf16>, vector<8x128xf32> -> vector<8x128xf32>
    %270 = arith.addf %267, %269 : vector<8x128xf32>
    %271 = vector.extract_strided_slice %270 {offsets = [0, 0], sizes = [8, 96], strides = [1, 1]} : vector<8x128xf32> to vector<8x96xf32>
    %272 = arith.negf %271 : vector<8x96xf32>
    %273 = math.exp %272 : vector<8x96xf32>
    %cst_46 = arith.constant 1.000000e+00 : f32
    %274 = vector.broadcast %cst_46 : f32 to vector<8x96xf32>
    %275 = arith.addf %274, %273 : vector<8x96xf32>
    %276 = arith.divf %274, %275 : vector<8x96xf32>
    %277 = vector.extract_strided_slice %270 {offsets = [0, 96], sizes = [8, 32], strides = [1, 1]} : vector<8x128xf32> to vector<8x32xf32>
    %278 = math.tanh %277 : vector<8x32xf32>
    %279 = vector.extract_strided_slice %276 {offsets = [0, 32], sizes = [8, 32], strides = [1, 1]} : vector<8x96xf32> to vector<8x32xf32>
    %280 = arith.mulf %279, %243 : vector<8x32xf32>
    %281 = vector.extract_strided_slice %276 {offsets = [0, 0], sizes = [8, 32], strides = [1, 1]} : vector<8x96xf32> to vector<8x32xf32>
    %282 = arith.mulf %281, %278 : vector<8x32xf32>
    %283 = arith.addf %280, %282 : vector<8x32xf32>
    %284 = vector.extract_strided_slice %276 {offsets = [0, 64], sizes = [8, 32], strides = [1, 1]} : vector<8x96xf32> to vector<8x32xf32>
    %285 = math.tanh %283 : vector<8x32xf32>
    %286 = arith.mulf %284, %285 : vector<8x32xf32>
    %287 = vector.extract_strided_slice %21 {offsets = [8, 0], sizes = [8, 128], strides = [1, 1]} : vector<64x128xf32> to vector<8x128xf32>
    %288 = arith.truncf %266 : vector<8x32xf32> to vector<8x32xbf16>
    %cst_47 = arith.constant dense<0.000000e+00> : vector<8x128xf32>
    %289 = tpu.matmul %288, %22, %cst_47 {dimension_numbers = #tpu.dot_dimension_numbers<[1], [0], [0], [1], [0, 0, 1, 1], [], []>} : vector<8x32xbf16>, vector<32x128xbf16>, vector<8x128xf32> -> vector<8x128xf32>
    %290 = arith.addf %287, %289 : vector<8x128xf32>
    %291 = vector.extract_strided_slice %290 {offsets = [0, 0], sizes = [8, 96], strides = [1, 1]} : vector<8x128xf32> to vector<8x96xf32>
    %292 = arith.negf %291 : vector<8x96xf32>
    %293 = math.exp %292 : vector<8x96xf32>
    %cst_48 = arith.constant 1.000000e+00 : f32
    %294 = vector.broadcast %cst_48 : f32 to vector<8x96xf32>
    %295 = arith.addf %294, %293 : vector<8x96xf32>
    %296 = arith.divf %294, %295 : vector<8x96xf32>
    %297 = vector.extract_strided_slice %290 {offsets = [0, 96], sizes = [8, 32], strides = [1, 1]} : vector<8x128xf32> to vector<8x32xf32>
    %298 = math.tanh %297 : vector<8x32xf32>
    %299 = vector.extract_strided_slice %296 {offsets = [0, 32], sizes = [8, 32], strides = [1, 1]} : vector<8x96xf32> to vector<8x32xf32>
    %300 = arith.mulf %299, %263 : vector<8x32xf32>
    %301 = vector.extract_strided_slice %296 {offsets = [0, 0], sizes = [8, 32], strides = [1, 1]} : vector<8x96xf32> to vector<8x32xf32>
    %302 = arith.mulf %301, %298 : vector<8x32xf32>
    %303 = arith.addf %300, %302 : vector<8x32xf32>
    %304 = vector.extract_strided_slice %296 {offsets = [0, 64], sizes = [8, 32], strides = [1, 1]} : vector<8x96xf32> to vector<8x32xf32>
    %305 = math.tanh %303 : vector<8x32xf32>
    %306 = arith.mulf %304, %305 : vector<8x32xf32>
    %307 = vector.extract_strided_slice %14 {offsets = [56, 0], sizes = [8, 128], strides = [1, 1]} : vector<64x128xf32> to vector<8x128xf32>
    %308 = arith.truncf %286 : vector<8x32xf32> to vector<8x32xbf16>
    %cst_49 = arith.constant dense<0.000000e+00> : vector<8x128xf32>
    %309 = tpu.matmul %308, %15, %cst_49 {dimension_numbers = #tpu.dot_dimension_numbers<[1], [0], [0], [1], [0, 0, 1, 1], [], []>} : vector<8x32xbf16>, vector<32x128xbf16>, vector<8x128xf32> -> vector<8x128xf32>
    %310 = arith.addf %307, %309 : vector<8x128xf32>
    %311 = vector.extract_strided_slice %310 {offsets = [0, 0], sizes = [8, 96], strides = [1, 1]} : vector<8x128xf32> to vector<8x96xf32>
    %312 = arith.negf %311 : vector<8x96xf32>
    %313 = math.exp %312 : vector<8x96xf32>
    %cst_50 = arith.constant 1.000000e+00 : f32
    %314 = vector.broadcast %cst_50 : f32 to vector<8x96xf32>
    %315 = arith.addf %314, %313 : vector<8x96xf32>
    %316 = arith.divf %314, %315 : vector<8x96xf32>
    %317 = vector.extract_strided_slice %310 {offsets = [0, 96], sizes = [8, 32], strides = [1, 1]} : vector<8x128xf32> to vector<8x32xf32>
    %318 = math.tanh %317 : vector<8x32xf32>
    %319 = vector.extract_strided_slice %316 {offsets = [0, 32], sizes = [8, 32], strides = [1, 1]} : vector<8x96xf32> to vector<8x32xf32>
    %320 = arith.mulf %319, %283 : vector<8x32xf32>
    %321 = vector.extract_strided_slice %316 {offsets = [0, 0], sizes = [8, 32], strides = [1, 1]} : vector<8x96xf32> to vector<8x32xf32>
    %322 = arith.mulf %321, %318 : vector<8x32xf32>
    %323 = arith.addf %320, %322 : vector<8x32xf32>
    %324 = vector.extract_strided_slice %316 {offsets = [0, 64], sizes = [8, 32], strides = [1, 1]} : vector<8x96xf32> to vector<8x32xf32>
    %325 = math.tanh %323 : vector<8x32xf32>
    %326 = arith.mulf %324, %325 : vector<8x32xf32>
    %327 = vector.extract_strided_slice %21 {offsets = [0, 0], sizes = [8, 128], strides = [1, 1]} : vector<64x128xf32> to vector<8x128xf32>
    %328 = arith.truncf %306 : vector<8x32xf32> to vector<8x32xbf16>
    %cst_51 = arith.constant dense<0.000000e+00> : vector<8x128xf32>
    %329 = tpu.matmul %328, %22, %cst_51 {dimension_numbers = #tpu.dot_dimension_numbers<[1], [0], [0], [1], [0, 0, 1, 1], [], []>} : vector<8x32xbf16>, vector<32x128xbf16>, vector<8x128xf32> -> vector<8x128xf32>
    %330 = arith.addf %327, %329 : vector<8x128xf32>
    %331 = vector.extract_strided_slice %330 {offsets = [0, 0], sizes = [8, 96], strides = [1, 1]} : vector<8x128xf32> to vector<8x96xf32>
    %332 = arith.negf %331 : vector<8x96xf32>
    %333 = math.exp %332 : vector<8x96xf32>
    %cst_52 = arith.constant 1.000000e+00 : f32
    %334 = vector.broadcast %cst_52 : f32 to vector<8x96xf32>
    %335 = arith.addf %334, %333 : vector<8x96xf32>
    %336 = arith.divf %334, %335 : vector<8x96xf32>
    %337 = vector.extract_strided_slice %330 {offsets = [0, 96], sizes = [8, 32], strides = [1, 1]} : vector<8x128xf32> to vector<8x32xf32>
    %338 = math.tanh %337 : vector<8x32xf32>
    %339 = vector.extract_strided_slice %336 {offsets = [0, 32], sizes = [8, 32], strides = [1, 1]} : vector<8x96xf32> to vector<8x32xf32>
    %340 = arith.mulf %339, %303 : vector<8x32xf32>
    %341 = vector.extract_strided_slice %336 {offsets = [0, 0], sizes = [8, 32], strides = [1, 1]} : vector<8x96xf32> to vector<8x32xf32>
    %342 = arith.mulf %341, %338 : vector<8x32xf32>
    %343 = arith.addf %340, %342 : vector<8x32xf32>
    %344 = vector.extract_strided_slice %336 {offsets = [0, 64], sizes = [8, 32], strides = [1, 1]} : vector<8x96xf32> to vector<8x32xf32>
    %345 = math.tanh %343 : vector<8x32xf32>
    %346 = arith.mulf %344, %345 : vector<8x32xf32>
    %347 = tpu.concatenate %46, %86, %126, %166, %206, %246, %286, %326 in 0 : vector<8x32xf32>, vector<8x32xf32>, vector<8x32xf32>, vector<8x32xf32>, vector<8x32xf32>, vector<8x32xf32>, vector<8x32xf32>, vector<8x32xf32> -> vector<64x32xf32>
    %348 = tpu.concatenate %346, %306, %266, %226, %186, %146, %106, %66 in 0 : vector<8x32xf32>, vector<8x32xf32>, vector<8x32xf32>, vector<8x32xf32>, vector<8x32xf32>, vector<8x32xf32>, vector<8x32xf32>, vector<8x32xf32> -> vector<64x32xf32>
    %c0_53 = arith.constant 0 : index
    %c0_54 = arith.constant 0 : index
    %349 = vector.load %arg9[%c0_53, %c0_54] : memref<64x32xbf16, #tpu.memory_space<vmem>>, vector<32x32xbf16>
    %350 = arith.truncf %347 : vector<64x32xf32> to vector<64x32xbf16>
    %cst_55 = arith.constant dense<0.000000e+00> : vector<64x32xf32>
    %351 = tpu.matmul %350, %349, %cst_55 {dimension_numbers = #tpu.dot_dimension_numbers<[1], [0], [0], [1], [0, 0, 1, 1], [], []>} : vector<64x32xbf16>, vector<32x32xbf16>, vector<64x32xf32> -> vector<64x32xf32>
    %c32 = arith.constant 32 : index
    %c0_56 = arith.constant 0 : index
    %352 = vector.load %arg9[%c32, %c0_56] : memref<64x32xbf16, #tpu.memory_space<vmem>>, vector<32x32xbf16>
    %353 = arith.truncf %348 : vector<64x32xf32> to vector<64x32xbf16>
    %cst_57 = arith.constant dense<0.000000e+00> : vector<64x32xf32>
    %354 = tpu.matmul %353, %352, %cst_57 {dimension_numbers = #tpu.dot_dimension_numbers<[1], [0], [0], [1], [0, 0, 1, 1], [], []>} : vector<64x32xbf16>, vector<32x32xbf16>, vector<64x32xf32> -> vector<64x32xf32>
    %355 = arith.addf %351, %354 : vector<64x32xf32>
    %c0_58 = arith.constant 0 : index
    %c0_59 = arith.constant 0 : index
    %356 = vector.load %arg10[%c0_58, %c0_59] : memref<1x32xf32, #tpu.memory_space<vmem>>, vector<1x32xf32>
    %357 = vector.broadcast %356 : vector<1x32xf32> to vector<64x32xf32>
    %358 = arith.addf %355, %357 : vector<64x32xf32>
    %cst_60 = arith.constant 0.000000e+00 : f32
    %359 = vector.broadcast %cst_60 : f32 to vector<64x32xf32>
    %360 = arith.maximumf %358, %359 : vector<64x32xf32>
    %361 = vector.shape_cast %360 : vector<64x32xf32> to vector<8x8x32xf32>
    %c0_61 = arith.constant 0 : index
    %c0_62 = arith.constant 0 : index
    %362 = vector.load %arg11[%c0_61, %c0_62] : memref<1x32xf32, #tpu.memory_space<vmem>>, vector<1x32xf32>
    %363 = vector.shape_cast %362 : vector<1x32xf32> to vector<1x1x32xf32>
    %c0_63 = arith.constant 0 : index
    %c0_64 = arith.constant 0 : index
    %364 = vector.load %arg12[%c0_63, %c0_64] : memref<1x1xf32, #tpu.memory_space<vmem>>, vector<1x1xf32>
    %365 = vector.broadcast %363 : vector<1x1x32xf32> to vector<8x8x32xf32>
    %366 = arith.mulf %361, %365 : vector<8x8x32xf32>
    %cst_65 = arith.constant dense<0.000000e+00> : vector<8x8xf32>
    %367 = vector.multi_reduction <add>, %366, %cst_65 [2] : vector<8x8x32xf32> to vector<8x8xf32>
    %368 = vector.broadcast %364 : vector<1x1xf32> to vector<8x8xf32>
    %369 = arith.addf %367, %368 : vector<8x8xf32>
    %370 = arith.negf %369 : vector<8x8xf32>
    %371 = math.exp %370 : vector<8x8xf32>
    %cst_66 = arith.constant 1.000000e+00 : f32
    %372 = vector.broadcast %cst_66 : f32 to vector<8x8xf32>
    %373 = arith.addf %372, %371 : vector<8x8xf32>
    %374 = arith.divf %372, %373 : vector<8x8xf32>
    %375 = vector.shape_cast %374 : vector<8x8xf32> to vector<1x8x8xf32>
    %c0_67 = arith.constant 0 : index
    %c0_68 = arith.constant 0 : index
    %c0_69 = arith.constant 0 : index
    %376 = vector.load %arg13[%c0_67, %c0_68, %c0_69] : memref<1x8x8xf32, #tpu.memory_space<vmem>>, vector<1x8x8xf32>
    tpu.vector_store %arg13[%c0_67, %c0_68, %c0_69], %375 {strides = array<i32>} : memref<1x8x8xf32, #tpu.memory_space<vmem>>, vector<1x8x8xf32>,
    return
  }
  func.func @transform_0(%arg0: i32) -> (i32, i32) {
    %c0_i32 = arith.constant 0 : i32
    %c0_i32_0 = arith.constant 0 : i32
    return %arg0, %c0_i32 : i32, i32
  }
  func.func @transform_1(%arg0: i32) -> (i32, i32) {
    %c0_i32 = arith.constant 0 : i32
    %c0_i32_0 = arith.constant 0 : i32
    %c0_i32_1 = arith.constant 0 : i32
    return %c0_i32, %c0_i32_0 : i32, i32
  }
  func.func @transform_2(%arg0: i32) -> (i32, i32) {
    %c0_i32 = arith.constant 0 : i32
    %c0_i32_0 = arith.constant 0 : i32
    %c0_i32_1 = arith.constant 0 : i32
    return %c0_i32, %c0_i32_0 : i32, i32
  }
  func.func @transform_3(%arg0: i32) -> (i32, i32) {
    %c0_i32 = arith.constant 0 : i32
    %c0_i32_0 = arith.constant 0 : i32
    %c0_i32_1 = arith.constant 0 : i32
    return %c0_i32, %c0_i32_0 : i32, i32
  }
  func.func @transform_4(%arg0: i32) -> (i32, i32) {
    %c0_i32 = arith.constant 0 : i32
    %c0_i32_0 = arith.constant 0 : i32
    %c0_i32_1 = arith.constant 0 : i32
    return %c0_i32, %c0_i32_0 : i32, i32
  }
  func.func @transform_5(%arg0: i32) -> (i32, i32) {
    %c0_i32 = arith.constant 0 : i32
    %c0_i32_0 = arith.constant 0 : i32
    %c0_i32_1 = arith.constant 0 : i32
    return %c0_i32, %c0_i32_0 : i32, i32
  }
  func.func @transform_6(%arg0: i32) -> (i32, i32) {
    %c0_i32 = arith.constant 0 : i32
    %c0_i32_0 = arith.constant 0 : i32
    %c0_i32_1 = arith.constant 0 : i32
    return %c0_i32, %c0_i32_0 : i32, i32
  }
  func.func @transform_7(%arg0: i32) -> (i32, i32) {
    %c0_i32 = arith.constant 0 : i32
    %c0_i32_0 = arith.constant 0 : i32
    %c0_i32_1 = arith.constant 0 : i32
    return %c0_i32, %c0_i32_0 : i32, i32
  }
  func.func @transform_8(%arg0: i32) -> (i32, i32) {
    %c0_i32 = arith.constant 0 : i32
    %c0_i32_0 = arith.constant 0 : i32
    %c0_i32_1 = arith.constant 0 : i32
    return %c0_i32, %c0_i32_0 : i32, i32
  }
  func.func @transform_9(%arg0: i32) -> (i32, i32) {
    %c0_i32 = arith.constant 0 : i32
    %c0_i32_0 = arith.constant 0 : i32
    %c0_i32_1 = arith.constant 0 : i32
    return %c0_i32, %c0_i32_0 : i32, i32
  }
  func.func @transform_10(%arg0: i32) -> (i32, i32) {
    %c0_i32 = arith.constant 0 : i32
    %c0_i32_0 = arith.constant 0 : i32
    %c0_i32_1 = arith.constant 0 : i32
    return %c0_i32, %c0_i32_0 : i32, i32
  }
  func.func @transform_11(%arg0: i32) -> (i32, i32) {
    %c0_i32 = arith.constant 0 : i32
    %c0_i32_0 = arith.constant 0 : i32
    %c0_i32_1 = arith.constant 0 : i32
    return %c0_i32, %c0_i32_0 : i32, i32
  }
  func.func @transform_12(%arg0: i32) -> (i32, i32, i32) {
    %c0_i32 = arith.constant 0 : i32
    %c0_i32_0 = arith.constant 0 : i32
    %c0_i32_1 = arith.constant 0 : i32
    return %arg0, %c0_i32, %c0_i32_0 : i32, i32, i32
  }
}

</mosaic_0001>

<llo_original>
// kernel: amr_baseline_forward.1
$region0: #{amr_baseline_forward.1}
  #allocation0 [shape = 'u32[]', space=smem, size = 0x4, offset = 0x4, fixed_abs, tag = 'smem constant byte address 0x4 - core index']
  #allocation1 [shape = 'u32[72,128]{1,0:T(1,128)}', space=vmem, size = 0x9000, scoped, tag = 'internal scratch']
  #allocation2 [shape = 'f32[1,1]{1,0:T(1,128)S(1)}', space=vmem, size = 0x200, scoped, tag = 'scoped memory for amr_baseline_forward.1']
  %s0 = inlined_call_operand.vmem [shape: s32[64,1], index: 0, kind: input, shape index: {}]
  %s1 = inlined_call_operand.vmem [shape: bf16[64,32], index: 1, kind: input, shape index: {}]
  %s2 = inlined_call_operand.vmem [shape: bf16[32,128], index: 2, kind: input, shape index: {}]
  %s3 = inlined_call_operand.vmem [shape: bf16[32,128], index: 3, kind: input, shape index: {}]
  %s4 = inlined_call_operand.vmem [shape: f32[1,128], index: 4, kind: input, shape index: {}]
  %s5 = inlined_call_operand.vmem [shape: bf16[32,128], index: 5, kind: input, shape index: {}]
  %s6 = inlined_call_operand.vmem [shape: bf16[32,128], index: 6, kind: input, shape index: {}]
  %s7 = inlined_call_operand.vmem [shape: f32[1,128], index: 7, kind: input, shape index: {}]
  %s8 = inlined_call_operand.vmem [shape: bf16[64,32], index: 8, kind: input, shape index: {}]
  %s9 = inlined_call_operand.vmem [shape: f32[1,32], index: 9, kind: input, shape index: {}]
  %s10 = inlined_call_operand.vmem [shape: f32[1,32], index: 10, kind: input, shape index: {}]
  %s11 = inlined_call_operand.<no memory space> [shape: f32[1,1], index: 11, kind: input, shape index: {}]
  %s12 = inlined_call_operand.vmem [shape: f32[1,8,8], index: 12, kind: output, shape index: {}]
  %s13 = sld [smem:[#allocation0]]
  $region58: #{amr_baseline_forward.1} parent=0
    _
  %s15 = ssub.s32 1, %s13
  %s16 = scalar_select 0, %s15, %s13
  %v17 = vstv %s11
  %18 = vst [vmem:[#allocation2] sm:$0x1] %v17
  // Predicated region
  $region2: #{amr_baseline_forward.1} parent=0 // pred_check
    _
  $region3: #{amr_baseline_forward.1} parent=0 // pred_check_branch
    %20 = sbr.rel (0) target = $region5
  $region4: #{amr_baseline_forward.1} parent=0 // pred_region
    _
  $region5: #{amr_baseline_forward.1} parent=0 // pred_fallthru
    _
  // Predicated region
  $region6: #{amr_baseline_forward.1} parent=0 // pred_check
    _
  $region7: #{amr_baseline_forward.1} parent=0 // pred_check_branch
    %22 = sbr.rel (0) target = $region9
  $region8: #{amr_baseline_forward.1} parent=0 // pred_region
    _
  $region9: #{amr_baseline_forward.1} parent=0 // pred_fallthru
    _
  // Predicated region
  $region10: #{amr_baseline_forward.1} parent=0 // pred_check
    _
  $region11: #{amr_baseline_forward.1} parent=0 // pred_check_branch
    %24 = sbr.rel (0) target = $region13
  $region12: #{amr_baseline_forward.1} parent=0 // pred_region
    _
  $region13: #{amr_baseline_forward.1} parent=0 // pred_fallthru
    _
  // Predicated region
  $region14: #{amr_baseline_forward.1} parent=0 // pred_check
    _
  $region15: #{amr_baseline_forward.1} parent=0 // pred_check_branch
    %26 = sbr.rel (0) target = $region17
  $region16: #{amr_baseline_forward.1} parent=0 // pred_region
    _
  $region17: #{amr_baseline_forward.1} parent=0 // pred_fallthru
    _
  // Predicated region
  $region18: #{amr_baseline_forward.1} parent=0 // pred_check
    _
  $region19: #{amr_baseline_forward.1} parent=0 // pred_check_branch
    %28 = sbr.rel (0) target = $region21
  $region20: #{amr_baseline_forward.1} parent=0 // pred_region
    _
  $region21: #{amr_baseline_forward.1} parent=0 // pred_fallthru
    _
  // Predicated region
  $region22: #{amr_baseline_forward.1} parent=0 // pred_check
    _
  $region23: #{amr_baseline_forward.1} parent=0 // pred_check_branch
    %30 = sbr.rel (0) target = $region25
  $region24: #{amr_baseline_forward.1} parent=0 // pred_region
    _
  $region25: #{amr_baseline_forward.1} parent=0 // pred_fallthru
    _
  // Predicated region
  $region26: #{amr_baseline_forward.1} parent=0 // pred_check
    _
  $region27: #{amr_baseline_forward.1} parent=0 // pred_check_branch
    %32 = sbr.rel (0) target = $region29
  $region28: #{amr_baseline_forward.1} parent=0 // pred_region
    _
  $region29: #{amr_baseline_forward.1} parent=0 // pred_fallthru
    _
  // Predicated region
  $region30: #{amr_baseline_forward.1} parent=0 // pred_check
    _
  $region31: #{amr_baseline_forward.1} parent=0 // pred_check_branch
    %34 = sbr.rel (0) target = $region33
  $region32: #{amr_baseline_forward.1} parent=0 // pred_region
    _
  $region33: #{amr_baseline_forward.1} parent=0 // pred_fallthru
    _
  // Predicated region
  $region34: #{amr_baseline_forward.1} parent=0 // pred_check
    _
  $region35: #{amr_baseline_forward.1} parent=0 // pred_check_branch
    %36 = sbr.rel (0) target = $region37
  $region36: #{amr_baseline_forward.1} parent=0 // pred_region
    _
  $region37: #{amr_baseline_forward.1} parent=0 // pred_fallthru
    _
  // Predicated region
  $region38: #{amr_baseline_forward.1} parent=0 // pred_check
    _
  $region39: #{amr_baseline_forward.1} parent=0 // pred_check_branch
    %38 = sbr.rel (0) target = $region41
  $region40: #{amr_baseline_forward.1} parent=0 // pred_region
    _
  $region41: #{amr_baseline_forward.1} parent=0 // pred_fallthru
    _
  // Predicated region
  $region42: #{amr_baseline_forward.1} parent=0 // pred_check
    _
  $region43: #{amr_baseline_forward.1} parent=0 // pred_check_branch
    %40 = sbr.rel (0) target = $region45
  $region44: #{amr_baseline_forward.1} parent=0 // pred_region
    _
  $region45: #{amr_baseline_forward.1} parent=0 // pred_fallthru
    _
  // Predicated region
  $region46: #{amr_baseline_forward.1} parent=0 // pred_check
    _
  $region47: #{amr_baseline_forward.1} parent=0 // pred_check_branch
    %42 = sbr.rel (0) target = $region49
  $region48: #{amr_baseline_forward.1} parent=0 // pred_region
    _
  $region49: #{amr_baseline_forward.1} parent=0 // pred_fallthru
    _
  %v44 = vld [vmem:[%s0] sm:$0xff]
  %v45 = vld [vmem:[%s0 + $0x8] sm:$0xff]
  %v46 = vld [vmem:[%s0 + $0x10] sm:$0xff]
  %v47 = vld [vmem:[%s0 + $0x18] sm:$0xff]
  %v48 = vld [vmem:[%s0 + $0x20] sm:$0xff]
  %v49 = vld [vmem:[%s0 + $0x28] sm:$0xff]
  %v50 = vld [vmem:[%s0 + $0x30] sm:$0xff]
  %v51 = vld [vmem:[%s0 + $0x38] sm:$0xff]
  %v52 = vlaneseq
  %v53 = vand.u32 %v52, 127
  %54 = vset.pattern.permute.xlu0 0
  %55 = vperm.xlu0 %54, %v44
  %v56 = vpop.permute.xlu0 %55
  %57 = vset.pattern.permute.xlu0 0
  %58 = vperm.xlu0 %57, %v45
  %v59 = vpop.permute.xlu0 %58
  %60 = vset.pattern.permute.xlu0 0
  %61 = vperm.xlu0 %60, %v46
  %v62 = vpop.permute.xlu0 %61
  %63 = vset.pattern.permute.xlu0 0
  %64 = vperm.xlu0 %63, %v47
  %v65 = vpop.permute.xlu0 %64
  %66 = vset.pattern.permute.xlu0 0
  %67 = vperm.xlu0 %66, %v48
  %v68 = vpop.permute.xlu0 %67
  %69 = vset.pattern.permute.xlu0 0
  %70 = vperm.xlu0 %69, %v49
  %v71 = vpop.permute.xlu0 %70
  %72 = vset.pattern.permute.xlu0 0
  %73 = vperm.xlu0 %72, %v50
  %v74 = vpop.permute.xlu0 %73
  %75 = vset.pattern.permute.xlu0 0
  %76 = vperm.xlu0 %75, %v51
  %v77 = vpop.permute.xlu0 %76
  %vm78 = vcmp.eq.s32.totalorder %v56, %v53
  %vm79 = vcmp.eq.s32.totalorder %v59, %v53
  %vm80 = vcmp.eq.s32.totalorder %v62, %v53
  %vm81 = vcmp.eq.s32.totalorder %v65, %v53
  %vm82 = vcmp.eq.s32.totalorder %v68, %v53
  %vm83 = vcmp.eq.s32.totalorder %v71, %v53
  %vm84 = vcmp.eq.s32.totalorder %v74, %v53
  %vm85 = vcmp.eq.s32.totalorder %v77, %v53
  %v86 = vsel %vm78, 1, 0
  %v87 = vsel %vm79, 1, 0
  %v88 = vsel %vm80, 1, 0
  %v89 = vsel %vm81, 1, 0
  %v90 = vsel %vm82, 1, 0
  %v91 = vsel %vm83, 1, 0
  %v92 = vsel %vm84, 1, 0
  %v93 = vsel %vm85, 1, 0
  %v94 = vcvt.s32.f32 %v86
  %v95 = vcvt.s32.f32 %v87
  %v96 = vcvt.s32.f32 %v88
  %v97 = vcvt.s32.f32 %v89
  %v98 = vcvt.s32.f32 %v90
  %v99 = vcvt.s32.f32 %v91
  %v100 = vcvt.s32.f32 %v92
  %v101 = vcvt.s32.f32 %v93
  %v102 = vpack.c.bf16 %v95, %v94
  %v103 = vpack.c.bf16 %v97, %v96
  %v104 = vpack.c.bf16 %v99, %v98
  %v105 = vpack.c.bf16 %v101, %v100
  %v106 = vld [vmem:[%s1] sm:$0xf]
  %v107 = vld [vmem:[%s1 + $0x4] sm:$0xf]
  %v108 = vld [vmem:[%s1 + $0x8] sm:$0xf]
  %v109 = vld [vmem:[%s1 + $0xc] sm:$0xf]
  %v110 = vld [vmem:[%s1 + $0x10] sm:$0xf]
  %v111 = vld [vmem:[%s1 + $0x14] sm:$0xf]
  %v112 = vld [vmem:[%s1 + $0x18] sm:$0xf]
  %v113 = vld [vmem:[%s1 + $0x1c] sm:$0xf]
  %v122 = vunpack.c.l.b16 %v106
  %v123 = vunpack.c.l.b16 %v107
  %v124 = vunpack.c.l.b16 %v108
  %v125 = vunpack.c.l.b16 %v109
  %v126 = vunpack.c.l.b16 %v110
  %v127 = vunpack.c.l.b16 %v111
  %v128 = vunpack.c.l.b16 %v112
  %v129 = vunpack.c.l.b16 %v113
  %v130 = vpack.c.b16 %v123, %v122
  %v131 = vpack.c.b16 %v125, %v124
  %v132 = vpack.c.b16 %v127, %v126
  %v133 = vpack.c.b16 %v129, %v128
  %vm138 = vcmask 523264
  %v140 = vsel %vm138, %v102, 0
  %v143 = vsel %vm138, %v103, 0
  %v146 = vsel %vm138, %v104, 0
  %v149 = vsel %vm138, %v105, 0
  %151 = vmatpush.bf16.msra.mxu0 0
  %152 = vmatpush.bf16.msra.mxu0 0
  %153 = vmatpush.bf16.msra.mxu0 0
  %154 = vmatpush.bf16.msra.mxu0 0
  %155 = vmatpush.bf16.msra.mxu0 %v133
  %156 = vmatpush.bf16.msra.mxu0 %v132
  %157 = vmatpush.bf16.msra.mxu0 %v131
  %158 = vmatpush.bf16.msra.mxu0 %v130
  %159 = vmatmul.bf16.gmra.mxu0 %v140
  %v160 = vpop.f32.mrf.mxu0
  %v161 = vadd.f32 0.0, %v160
  %v162 = vpop.f32.mrf.mxu0
  %v163 = vadd.f32 0.0, %v162
  %164 = vmatmul.bf16.gmra.mxu0 %v143
  %v165 = vpop.f32.mrf.mxu0
  %v166 = vadd.f32 0.0, %v165
  %v167 = vpop.f32.mrf.mxu0
  %v168 = vadd.f32 0.0, %v167
  %169 = vmatmul.bf16.gmra.mxu0 %v146
  %v170 = vpop.f32.mrf.mxu0
  %v171 = vadd.f32 0.0, %v170
  %v172 = vpop.f32.mrf.mxu0
  %v173 = vadd.f32 0.0, %v172
  %174 = vmatmul.bf16.gmra.mxu0 %v149
  %v175 = vpop.f32.mrf.mxu0
  %v176 = vadd.f32 0.0, %v175
  %v177 = vpop.f32.mrf.mxu0
  %v178 = vadd.f32 0.0, %v177
  %179 = vdwg.mxu0
  %v180 = vld [vmem:[%s2] sm:$0xf]
  %v181 = vld [vmem:[%s2 + $0x4] sm:$0xf]
  %v182 = vld [vmem:[%s2 + $0x8] sm:$0xf]
  %v183 = vld [vmem:[%s2 + $0xc] sm:$0xf]
  %v184 = vpack.c.bf16 %v163, %v161
  %v185 = vpack.c.bf16 %v168, %v166
  %v186 = vpack.c.bf16 %v173, %v171
  %v187 = vpack.c.bf16 %v178, %v176
  %v188 = vld [vmem:[%s4] sm:$0x1]
  %v190 = vperm.slane %v188, 0
  %v196 = vunpack.c.l.b16 %v180
  %v197 = vunpack.c.l.b16 %v181
  %v198 = vunpack.c.l.b16 %v182
  %v199 = vunpack.c.l.b16 %v183
  %v200 = vpack.c.b16 %v197, %v196
  %v201 = vpack.c.b16 %v199, %v198
  %vm204 = vcmask 261120
  %v206 = vsel %vm204, %v184, 0
  %v209 = vsel %vm204, %v185, 0
  %v212 = vsel %vm204, %v186, 0
  %v215 = vsel %vm204, %v187, 0
  %217 = vmatpush.bf16.msra.mxu0 0
  %218 = vmatpush.bf16.msra.mxu0 0
  %219 = vmatpush.bf16.msra.mxu0 0
  %220 = vmatpush.bf16.msra.mxu0 0
  %221 = vmatpush.bf16.msra.mxu0 0
  %222 = vmatpush.bf16.msra.mxu0 0
  %223 = vmatpush.bf16.msra.mxu0 %v201
  %224 = vmatpush.bf16.msra.mxu0 %v200
  %225 = vmatmul.bf16.gmra.mxu0 %v206
  %v226 = vpop.f32.mrf.mxu0
  %v227 = vadd.f32 %v190, %v226
  %v228 = vpop.f32.mrf.mxu0
  %v229 = vadd.f32 %v190, %v228
  %230 = vmatmul.bf16.gmra.mxu0 %v209
  %v231 = vpop.f32.mrf.mxu0
  %v232 = vadd.f32 %v190, %v231
  %v233 = vpop.f32.mrf.mxu0
  %v234 = vadd.f32 %v190, %v233
  %235 = vmatmul.bf16.gmra.mxu0 %v212
  %v236 = vpop.f32.mrf.mxu0
  %v237 = vadd.f32 %v190, %v236
  %v238 = vpop.f32.mrf.mxu0
  %v239 = vadd.f32 %v190, %v238
  %240 = vmatmul.bf16.gmra.mxu0 %v215
  %v241 = vpop.f32.mrf.mxu0
  %v242 = vadd.f32 %v190, %v241
  %v243 = vpop.f32.mrf.mxu0
  %v244 = vadd.f32 %v190, %v243
  %245 = vdwg.mxu0
  %v246 = vld [vmem:[%s3] sm:$0xf]
  %v247 = vld [vmem:[%s3 + $0x4] sm:$0xf]
  %v248 = vld [vmem:[%s3 + $0x8] sm:$0xf]
  %v249 = vld [vmem:[%s3 + $0xc] sm:$0xf]
  %v250 = vld [vmem:[%s5] sm:$0xf]
  %v251 = vld [vmem:[%s5 + $0x4] sm:$0xf]
  %v252 = vld [vmem:[%s5 + $0x8] sm:$0xf]
  %v253 = vld [vmem:[%s5 + $0xc] sm:$0xf]
  %v254 = vld [vmem:[%s7] sm:$0x1]
  %v256 = vperm.slane %v254, 0
  %v262 = vunpack.c.l.b16 %v250
  %v263 = vunpack.c.l.b16 %v251
  %v264 = vunpack.c.l.b16 %v252
  %v265 = vunpack.c.l.b16 %v253
  %v266 = vpack.c.b16 %v263, %v262
  %v267 = vpack.c.b16 %v265, %v264
  %270 = vmatpush.bf16.msra.mxu0 0
  %271 = vmatpush.bf16.msra.mxu0 0
  %272 = vmatpush.bf16.msra.mxu0 0
  %273 = vmatpush.bf16.msra.mxu0 0
  %274 = vmatpush.bf16.msra.mxu0 0
  %275 = vmatpush.bf16.msra.mxu0 0
  %276 = vmatpush.bf16.msra.mxu0 %v267
  %277 = vmatpush.bf16.msra.mxu0 %v266
  %278 = vmatmul.bf16.gmra.mxu0 %v206
  %v279 = vpop.f32.mrf.mxu0
  %v280 = vadd.f32 %v256, %v279
  %v281 = vpop.f32.mrf.mxu0
  %v282 = vadd.f32 %v256, %v281
  %283 = vmatmul.bf16.gmra.mxu0 %v209
  %v284 = vpop.f32.mrf.mxu0
  %v285 = vadd.f32 %v256, %v284
  %v286 = vpop.f32.mrf.mxu0
  %v287 = vadd.f32 %v256, %v286
  %288 = vmatmul.bf16.gmra.mxu0 %v212
  %v289 = vpop.f32.mrf.mxu0
  %v290 = vadd.f32 %v256, %v289
  %v291 = vpop.f32.mrf.mxu0
  %v292 = vadd.f32 %v256, %v291
  %293 = vmatmul.bf16.gmra.mxu0 %v215
  %v294 = vpop.f32.mrf.mxu0
  %v295 = vadd.f32 %v256, %v294
  %v296 = vpop.f32.mrf.mxu0
  %v297 = vadd.f32 %v256, %v296
  %298 = vdwg.mxu0
  %v299 = vld [vmem:[%s6] sm:$0xf]
  %v300 = vld [vmem:[%s6 + $0x4] sm:$0xf]
  %v301 = vld [vmem:[%s6 + $0x8] sm:$0xf]
  %v302 = vld [vmem:[%s6 + $0xc] sm:$0xf]
  %v307 = vunpack.c.l.b16 %v246
  %v308 = vunpack.c.l.b16 %v247
  %v309 = vunpack.c.l.b16 %v248
  %v310 = vunpack.c.l.b16 %v249
  %v311 = vpack.c.b16 %v308, %v307
  %v312 = vpack.c.b16 %v310, %v309
  %v316 = vsel %vm204, 0, 0
  %318 = vmatpush.bf16.msra.mxu0 0
  %319 = vmatpush.bf16.msra.mxu0 0
  %320 = vmatpush.bf16.msra.mxu0 0
  %321 = vmatpush.bf16.msra.mxu0 0
  %322 = vmatpush.bf16.msra.mxu0 0
  %323 = vmatpush.bf16.msra.mxu0 0
  %324 = vmatpush.bf16.msra.mxu0 %v312
  %325 = vmatpush.bf16.msra.mxu0 %v311
  %326 = vmatmul.bf16.gmra.mxu0 %v316
  %v327 = vpop.f32.mrf.mxu0
  %v328 = vadd.f32 0.0, %v327
  %v329 = vpop.f32.mrf.mxu0
  %330 = vdwg.mxu0
  %v331 = vadd.f32 %v227, %v328
  %v332 = vxor.u32 %v331, 2147483648
  %v333 = vmul.f32 %v332, 1.442695
  %v334 = vpow.pop %v333
  %v335 = vadd.f32 %v334, 1.0
  %v336 = vrcp.pop %v335
  %v337 = vmul.f32 %v335, %v336
  %v338 = vsub.f32 1.0, %v337
  %v339 = vmul.f32 %v336, %v338
  %v340 = vadd.f32 %v336, %v339
  %vm341 = vweird.f32 %v335
  %vm342 = vweird.f32 %v336
  %vm343 = vmor %vm341, %vm342
  %v344 = vsel %vm343, %v336, %v340
  %v345 = vand.u32 2147483647, %v335
  %vm346 = vcmp.eq.f32.partialorder %v345, 8.507059e+37
  %v347 = vand.u32 %v335, 2147483648
  %v348 = vor.u32 1.1754944e-38, %v347
  %v349 = vsel %vm346, %v348, %v344
  %v350 = vmul.f32 1.0, %v349
  %v351 = vtanh.pop %v331
  %v352 = vmul.f32 %v350, 0.0
  %354 = vrot.lane.b32.xlu0 %v351, 32
  %v355 = vpop.permute.xlu0 %354
  %v357 = vmul.f32 %v350, %v355
  %359 = vrot.lane.b32.xlu0 %v357, 32
  %v360 = vpop.permute.xlu0 %359
  %v362 = vadd.f32 %v352, %v360
  %v363 = vtanh.pop %v362
  %365 = vrot.lane.b32.xlu0 %v363, 32
  %v366 = vpop.permute.xlu0 %365
  %v368 = vmul.f32 %v350, %v366
  %v373 = vunpack.c.l.b16 %v299
  %v374 = vunpack.c.l.b16 %v300
  %v375 = vunpack.c.l.b16 %v301
  %v376 = vunpack.c.l.b16 %v302
  %v377 = vpack.c.b16 %v374, %v373
  %v378 = vpack.c.b16 %v376, %v375
  %381 = vmatpush.bf16.msra.mxu0 0
  %382 = vmatpush.bf16.msra.mxu0 0
  %383 = vmatpush.bf16.msra.mxu0 0
  %384 = vmatpush.bf16.msra.mxu0 0
  %385 = vmatpush.bf16.msra.mxu0 0
  %386 = vmatpush.bf16.msra.mxu0 0
  %387 = vmatpush.bf16.msra.mxu0 %v378
  %388 = vmatpush.bf16.msra.mxu0 %v377
  %389 = vmatmul.bf16.gmra.mxu0 %v316
  %v390 = vpop.f32.mrf.mxu0
  %v391 = vadd.f32 0.0, %v390
  %v392 = vpop.f32.mrf.mxu0
  %393 = vdwg.mxu0
  %v394 = vadd.f32 %v297, %v391
  %v395 = vxor.u32 %v394, 2147483648
  %v396 = vmul.f32 %v395, 1.442695
  %v397 = vpow.pop %v396
  %v398 = vadd.f32 %v397, 1.0
  %v399 = vrcp.pop %v398
  %v400 = vmul.f32 %v398, %v399
  %v401 = vsub.f32 1.0, %v400
  %v402 = vmul.f32 %v399, %v401
  %v403 = vadd.f32 %v399, %v402
  %vm404 = vweird.f32 %v398
  %vm405 = vweird.f32 %v399
  %vm406 = vmor %vm404, %vm405
  %v407 = vsel %vm406, %v399, %v403
  %v408 = vand.u32 2147483647, %v398
  %vm409 = vcmp.eq.f32.partialorder %v408, 8.507059e+37
  %v410 = vand.u32 %v398, 2147483648
  %v411 = vor.u32 1.1754944e-38, %v410
  %v412 = vsel %vm409, %v411, %v407
  %v413 = vmul.f32 1.0, %v412
  %v414 = vtanh.pop %v394
  %v415 = vmul.f32 %v413, 0.0
  %417 = vrot.lane.b32.xlu0 %v414, 32
  %v418 = vpop.permute.xlu0 %417
  %v420 = vmul.f32 %v413, %v418
  %422 = vrot.lane.b32.xlu0 %v420, 32
  %v423 = vpop.permute.xlu0 %422
  %v425 = vadd.f32 %v415, %v423
  %v426 = vtanh.pop %v425
  %428 = vrot.lane.b32.xlu0 %v426, 32
  %v429 = vpop.permute.xlu0 %428
  %v431 = vmul.f32 %v413, %v429
  %v432 = vpack.c.bf16 %v368, %v368
  %434 = vrot.lane.b32.xlu0 %v432, 64
  %v435 = vpop.permute.xlu0 %434
  %v437 = vsel %vm204, %v435, 0
  %439 = vmatpush.bf16.msra.mxu0 0
  %440 = vmatpush.bf16.msra.mxu0 0
  %441 = vmatpush.bf16.msra.mxu0 0
  %442 = vmatpush.bf16.msra.mxu0 0
  %443 = vmatpush.bf16.msra.mxu0 0
  %444 = vmatpush.bf16.msra.mxu0 0
  %445 = vmatpush.bf16.msra.mxu0 %v312
  %446 = vmatpush.bf16.msra.mxu0 %v311
  %447 = vmatmul.bf16.gmra.mxu0 %v437
  %v448 = vpop.f32.mrf.mxu0
  %v449 = vadd.f32 0.0, %v448
  %v450 = vpop.f32.mrf.mxu0
  %451 = vdwg.mxu0
  %v452 = vadd.f32 %v229, %v449
  %v453 = vxor.u32 %v452, 2147483648
  %v454 = vmul.f32 %v453, 1.442695
  %v455 = vpow.pop %v454
  %v456 = vadd.f32 %v455, 1.0
  %v457 = vrcp.pop %v456
  %v458 = vmul.f32 %v456, %v457
  %v459 = vsub.f32 1.0, %v458
  %v460 = vmul.f32 %v457, %v459
  %v461 = vadd.f32 %v457, %v460
  %vm462 = vweird.f32 %v456
  %vm463 = vweird.f32 %v457
  %vm464 = vmor %vm462, %vm463
  %v465 = vsel %vm464, %v457, %v461
  %v466 = vand.u32 2147483647, %v456
  %vm467 = vcmp.eq.f32.partialorder %v466, 8.507059e+37
  %v468 = vand.u32 %v456, 2147483648
  %v469 = vor.u32 1.1754944e-38, %v468
  %v470 = vsel %vm467, %v469, %v465
  %v471 = vmul.f32 1.0, %v470
  %v472 = vtanh.pop %v452
  %v473 = vmul.f32 %v471, %v362
  %475 = vrot.lane.b32.xlu0 %v472, 32
  %v476 = vpop.permute.xlu0 %475
  %v478 = vmul.f32 %v471, %v476
  %480 = vrot.lane.b32.xlu0 %v478, 32
  %v481 = vpop.permute.xlu0 %480
  %v483 = vadd.f32 %v473, %v481
  %v484 = vtanh.pop %v483
  %486 = vrot.lane.b32.xlu0 %v484, 32
  %v487 = vpop.permute.xlu0 %486
  %v489 = vmul.f32 %v471, %v487
  %v490 = vpack.c.bf16 %v431, %v431
  %492 = vrot.lane.b32.xlu0 %v490, 64
  %v493 = vpop.permute.xlu0 %492
  %v495 = vsel %vm204, %v493, 0
  %497 = vmatpush.bf16.msra.mxu0 0
  %498 = vmatpush.bf16.msra.mxu0 0
  %499 = vmatpush.bf16.msra.mxu0 0
  %500 = vmatpush.bf16.msra.mxu0 0
  %501 = vmatpush.bf16.msra.mxu0 0
  %502 = vmatpush.bf16.msra.mxu0 0
  %503 = vmatpush.bf16.msra.mxu0 %v378
  %504 = vmatpush.bf16.msra.mxu0 %v377
  %505 = vmatmul.bf16.gmra.mxu0 %v495
  %v506 = vpop.f32.mrf.mxu0
  %v507 = vadd.f32 0.0, %v506
  %v508 = vpop.f32.mrf.mxu0
  %509 = vdwg.mxu0
  %v510 = vadd.f32 %v295, %v507
  %v511 = vxor.u32 %v510, 2147483648
  %v512 = vmul.f32 %v511, 1.442695
  %v513 = vpow.pop %v512
  %v514 = vadd.f32 %v513, 1.0
  %v515 = vrcp.pop %v514
  %v516 = vmul.f32 %v514, %v515
  %v517 = vsub.f32 1.0, %v516
  %v518 = vmul.f32 %v515, %v517
  %v519 = vadd.f32 %v515, %v518
  %vm520 = vweird.f32 %v514
  %vm521 = vweird.f32 %v515
  %vm522 = vmor %vm520, %vm521
  %v523 = vsel %vm522, %v515, %v519
  %v524 = vand.u32 2147483647, %v514
  %vm525 = vcmp.eq.f32.partialorder %v524, 8.507059e+37
  %v526 = vand.u32 %v514, 2147483648
  %v527 = vor.u32 1.1754944e-38, %v526
  %v528 = vsel %vm525, %v527, %v523
  %v529 = vmul.f32 1.0, %v528
  %v530 = vtanh.pop %v510
  %v531 = vmul.f32 %v529, %v425
  %533 = vrot.lane.b32.xlu0 %v530, 32
  %v534 = vpop.permute.xlu0 %533
  %v536 = vmul.f32 %v529, %v534
  %538 = vrot.lane.b32.xlu0 %v536, 32
  %v539 = vpop.permute.xlu0 %538
  %v541 = vadd.f32 %v531, %v539
  %v542 = vtanh.pop %v541
  %544 = vrot.lane.b32.xlu0 %v542, 32
  %v545 = vpop.permute.xlu0 %544
  %v547 = vmul.f32 %v529, %v545
  %v548 = vpack.c.bf16 %v489, %v489
  %550 = vrot.lane.b32.xlu0 %v548, 64
  %v551 = vpop.permute.xlu0 %550
  %v553 = vsel %vm204, %v551, 0
  %555 = vmatpush.bf16.msra.mxu0 0
  %556 = vmatpush.bf16.msra.mxu0 0
  %557 = vmatpush.bf16.msra.mxu0 0
  %558 = vmatpush.bf16.msra.mxu0 0
  %559 = vmatpush.bf16.msra.mxu0 0
  %560 = vmatpush.bf16.msra.mxu0 0
  %561 = vmatpush.bf16.msra.mxu0 %v312
  %562 = vmatpush.bf16.msra.mxu0 %v311
  %563 = vmatmul.bf16.gmra.mxu0 %v553
  %v564 = vpop.f32.mrf.mxu0
  %v565 = vadd.f32 0.0, %v564
  %v566 = vpop.f32.mrf.mxu0
  %567 = vdwg.mxu0
  %v568 = vadd.f32 %v232, %v565
  %v569 = vxor.u32 %v568, 2147483648
  %v570 = vmul.f32 %v569, 1.442695
  %v571 = vpow.pop %v570
  %v572 = vadd.f32 %v571, 1.0
  %v573 = vrcp.pop %v572
  %v574 = vmul.f32 %v572, %v573
  %v575 = vsub.f32 1.0, %v574
  %v576 = vmul.f32 %v573, %v575
  %v577 = vadd.f32 %v573, %v576
  %vm578 = vweird.f32 %v572
  %vm579 = vweird.f32 %v573
  %vm580 = vmor %vm578, %vm579
  %v581 = vsel %vm580, %v573, %v577
  %v582 = vand.u32 2147483647, %v572
  %vm583 = vcmp.eq.f32.partialorder %v582, 8.507059e+37
  %v584 = vand.u32 %v572, 2147483648
  %v585 = vor.u32 1.1754944e-38, %v584
  %v586 = vsel %vm583, %v585, %v581
  %v587 = vmul.f32 1.0, %v586
  %v588 = vtanh.pop %v568
  %v589 = vmul.f32 %v587, %v483
  %591 = vrot.lane.b32.xlu0 %v588, 32
  %v592 = vpop.permute.xlu0 %591
  %v594 = vmul.f32 %v587, %v592
  %596 = vrot.lane.b32.xlu0 %v594, 32
  %v597 = vpop.permute.xlu0 %596
  %v599 = vadd.f32 %v589, %v597
  %v600 = vtanh.pop %v599
  %602 = vrot.lane.b32.xlu0 %v600, 32
  %v603 = vpop.permute.xlu0 %602
  %v605 = vmul.f32 %v587, %v603
  %v606 = vpack.c.bf16 %v547, %v547
  %608 = vrot.lane.b32.xlu0 %v606, 64
  %v609 = vpop.permute.xlu0 %608
  %v611 = vsel %vm204, %v609, 0
  %613 = vmatpush.bf16.msra.mxu0 0
  %614 = vmatpush.bf16.msra.mxu0 0
  %615 = vmatpush.bf16.msra.mxu0 0
  %616 = vmatpush.bf16.msra.mxu0 0
  %617 = vmatpush.bf16.msra.mxu0 0
  %618 = vmatpush.bf16.msra.mxu0 0
  %619 = vmatpush.bf16.msra.mxu0 %v378
  %620 = vmatpush.bf16.msra.mxu0 %v377
  %621 = vmatmul.bf16.gmra.mxu0 %v611
  %v622 = vpop.f32.mrf.mxu0
  %v623 = vadd.f32 0.0, %v622
  %v624 = vpop.f32.mrf.mxu0
  %625 = vdwg.mxu0
  %v626 = vadd.f32 %v292, %v623
  %v627 = vxor.u32 %v626, 2147483648
  %v628 = vmul.f32 %v627, 1.442695
  %v629 = vpow.pop %v628
  %v630 = vadd.f32 %v629, 1.0
  %v631 = vrcp.pop %v630
  %v632 = vmul.f32 %v630, %v631
  %v633 = vsub.f32 1.0, %v632
  %v634 = vmul.f32 %v631, %v633
  %v635 = vadd.f32 %v631, %v634
  %vm636 = vweird.f32 %v630
  %vm637 = vweird.f32 %v631
  %vm638 = vmor %vm636, %vm637
  %v639 = vsel %vm638, %v631, %v635
  %v640 = vand.u32 2147483647, %v630
  %vm641 = vcmp.eq.f32.partialorder %v640, 8.507059e+37
  %v642 = vand.u32 %v630, 2147483648
  %v643 = vor.u32 1.1754944e-38, %v642
  %v644 = vsel %vm641, %v643, %v639
  %v645 = vmul.f32 1.0, %v644
  %v646 = vtanh.pop %v626
  %v647 = vmul.f32 %v645, %v541
  %649 = vrot.lane.b32.xlu0 %v646, 32
  %v650 = vpop.permute.xlu0 %649
  %v652 = vmul.f32 %v645, %v650
  %654 = vrot.lane.b32.xlu0 %v652, 32
  %v655 = vpop.permute.xlu0 %654
  %v657 = vadd.f32 %v647, %v655
  %v658 = vtanh.pop %v657
  %660 = vrot.lane.b32.xlu0 %v658, 32
  %v661 = vpop.permute.xlu0 %660
  %v663 = vmul.f32 %v645, %v661
  %v664 = vpack.c.bf16 %v605, %v605
  %666 = vrot.lane.b32.xlu0 %v664, 64
  %v667 = vpop.permute.xlu0 %666
  %v669 = vsel %vm204, %v667, 0
  %671 = vmatpush.bf16.msra.mxu0 0
  %672 = vmatpush.bf16.msra.mxu0 0
  %673 = vmatpush.bf16.msra.mxu0 0
  %674 = vmatpush.bf16.msra.mxu0 0
  %675 = vmatpush.bf16.msra.mxu0 0
  %676 = vmatpush.bf16.msra.mxu0 0
  %677 = vmatpush.bf16.msra.mxu0 %v312
  %678 = vmatpush.bf16.msra.mxu0 %v311
  %679 = vmatmul.bf16.gmra.mxu0 %v669
  %v680 = vpop.f32.mrf.mxu0
  %v681 = vadd.f32 0.0, %v680
  %v682 = vpop.f32.mrf.mxu0
  %683 = vdwg.mxu0
  %v684 = vadd.f32 %v234, %v681
  %v685 = vxor.u32 %v684, 2147483648
  %v686 = vmul.f32 %v685, 1.442695
  %v687 = vpow.pop %v686
  %v688 = vadd.f32 %v687, 1.0
  %v689 = vrcp.pop %v688
  %v690 = vmul.f32 %v688, %v689
  %v691 = vsub.f32 1.0, %v690
  %v692 = vmul.f32 %v689, %v691
  %v693 = vadd.f32 %v689, %v692
  %vm694 = vweird.f32 %v688
  %vm695 = vweird.f32 %v689
  %vm696 = vmor %vm694, %vm695
  %v697 = vsel %vm696, %v689, %v693
  %v698 = vand.u32 2147483647, %v688
  %vm699 = vcmp.eq.f32.partialorder %v698, 8.507059e+37
  %v700 = vand.u32 %v688, 2147483648
  %v701 = vor.u32 1.1754944e-38, %v700
  %v702 = vsel %vm699, %v701, %v697
  %v703 = vmul.f32 1.0, %v702
  %v704 = vtanh.pop %v684
  %v705 = vmul.f32 %v703, %v599
  %707 = vrot.lane.b32.xlu0 %v704, 32
  %v708 = vpop.permute.xlu0 %707
  %v710 = vmul.f32 %v703, %v708
  %712 = vrot.lane.b32.xlu0 %v710, 32
  %v713 = vpop.permute.xlu0 %712
  %v715 = vadd.f32 %v705, %v713
  %v716 = vtanh.pop %v715
  %718 = vrot.lane.b32.xlu0 %v716, 32
  %v719 = vpop.permute.xlu0 %718
  %v721 = vmul.f32 %v703, %v719
  %v722 = vpack.c.bf16 %v663, %v663
  %724 = vrot.lane.b32.xlu0 %v722, 64
  %v725 = vpop.permute.xlu0 %724
  %v727 = vsel %vm204, %v725, 0
  %729 = vmatpush.bf16.msra.mxu0 0
  %730 = vmatpush.bf16.msra.mxu0 0
  %731 = vmatpush.bf16.msra.mxu0 0
  %732 = vmatpush.bf16.msra.mxu0 0
  %733 = vmatpush.bf16.msra.mxu0 0
  %734 = vmatpush.bf16.msra.mxu0 0
  %735 = vmatpush.bf16.msra.mxu0 %v378
  %736 = vmatpush.bf16.msra.mxu0 %v377
  %737 = vmatmul.bf16.gmra.mxu0 %v727
  %v738 = vpop.f32.mrf.mxu0
  %v739 = vadd.f32 0.0, %v738
  %v740 = vpop.f32.mrf.mxu0
  %741 = vdwg.mxu0
  %v742 = vadd.f32 %v290, %v739
  %v743 = vxor.u32 %v742, 2147483648
  %v744 = vmul.f32 %v743, 1.442695
  %v745 = vpow.pop %v744
  %v746 = vadd.f32 %v745, 1.0
  %v747 = vrcp.pop %v746
  %v748 = vmul.f32 %v746, %v747
  %v749 = vsub.f32 1.0, %v748
  %v750 = vmul.f32 %v747, %v749
  %v751 = vadd.f32 %v747, %v750
  %vm752 = vweird.f32 %v746
  %vm753 = vweird.f32 %v747
  %vm754 = vmor %vm752, %vm753
  %v755 = vsel %vm754, %v747, %v751
  %v756 = vand.u32 2147483647, %v746
  %vm757 = vcmp.eq.f32.partialorder %v756, 8.507059e+37
  %v758 = vand.u32 %v746, 2147483648
  %v759 = vor.u32 1.1754944e-38, %v758
  %v760 = vsel %vm757, %v759, %v755
  %v761 = vmul.f32 1.0, %v760
  %v762 = vtanh.pop %v742
  %v763 = vmul.f32 %v761, %v657
  %765 = vrot.lane.b32.xlu0 %v762, 32
  %v766 = vpop.permute.xlu0 %765
  %v768 = vmul.f32 %v761, %v766
  %770 = vrot.lane.b32.xlu0 %v768, 32
  %v771 = vpop.permute.xlu0 %770
  %v773 = vadd.f32 %v763, %v771
  %v774 = vtanh.pop %v773
  %776 = vrot.lane.b32.xlu0 %v774, 32
  %v777 = vpop.permute.xlu0 %776
  %v779 = vmul.f32 %v761, %v777
  %v780 = vpack.c.bf16 %v721, %v721
  %782 = vrot.lane.b32.xlu0 %v780, 64
  %v783 = vpop.permute.xlu0 %782
  %v785 = vsel %vm204, %v783, 0
  %787 = vmatpush.bf16.msra.mxu0 0
  %788 = vmatpush.bf16.msra.mxu0 0
  %789 = vmatpush.bf16.msra.mxu0 0
  %790 = vmatpush.bf16.msra.mxu0 0
  %791 = vmatpush.bf16.msra.mxu0 0
  %792 = vmatpush.bf16.msra.mxu0 0
  %793 = vmatpush.bf16.msra.mxu0 %v312
  %794 = vmatpush.bf16.msra.mxu0 %v311
  %795 = vmatmul.bf16.gmra.mxu0 %v785
  %v796 = vpop.f32.mrf.mxu0
  %v797 = vadd.f32 0.0, %v796
  %v798 = vpop.f32.mrf.mxu0
  %799 = vdwg.mxu0
  %v800 = vadd.f32 %v237, %v797
  %v801 = vxor.u32 %v800, 2147483648
  %v802 = vmul.f32 %v801, 1.442695
  %v803 = vpow.pop %v802
  %v804 = vadd.f32 %v803, 1.0
  %v805 = vrcp.pop %v804
  %v806 = vmul.f32 %v804, %v805
  %v807 = vsub.f32 1.0, %v806
  %v808 = vmul.f32 %v805, %v807
  %v809 = vadd.f32 %v805, %v808
  %vm810 = vweird.f32 %v804
  %vm811 = vweird.f32 %v805
  %vm812 = vmor %vm810, %vm811
  %v813 = vsel %vm812, %v805, %v809
  %v814 = vand.u32 2147483647, %v804
  %vm815 = vcmp.eq.f32.partialorder %v814, 8.507059e+37
  %v816 = vand.u32 %v804, 2147483648
  %v817 = vor.u32 1.1754944e-38, %v816
  %v818 = vsel %vm815, %v817, %v813
  %v819 = vmul.f32 1.0, %v818
  %v820 = vtanh.pop %v800
  %v821 = vmul.f32 %v819, %v715
  %823 = vrot.lane.b32.xlu0 %v820, 32
  %v824 = vpop.permute.xlu0 %823
  %v826 = vmul.f32 %v819, %v824
  %828 = vrot.lane.b32.xlu0 %v826, 32
  %v829 = vpop.permute.xlu0 %828
  %v831 = vadd.f32 %v821, %v829
  %v832 = vtanh.pop %v831
  %834 = vrot.lane.b32.xlu0 %v832, 32
  %v835 = vpop.permute.xlu0 %834
  %v837 = vmul.f32 %v819, %v835
  %v838 = vpack.c.bf16 %v779, %v779
  %840 = vrot.lane.b32.xlu0 %v838, 64
  %v841 = vpop.permute.xlu0 %840
  %v843 = vsel %vm204, %v841, 0
  %845 = vmatpush.bf16.msra.mxu0 0
  %846 = vmatpush.bf16.msra.mxu0 0
  %847 = vmatpush.bf16.msra.mxu0 0
  %848 = vmatpush.bf16.msra.mxu0 0
  %849 = vmatpush.bf16.msra.mxu0 0
  %850 = vmatpush.bf16.msra.mxu0 0
  %851 = vmatpush.bf16.msra.mxu0 %v378
  %852 = vmatpush.bf16.msra.mxu0 %v377
  %853 = vmatmul.bf16.gmra.mxu0 %v843
  %v854 = vpop.f32.mrf.mxu0
  %v855 = vadd.f32 0.0, %v854
  %v856 = vpop.f32.mrf.mxu0
  %857 = vdwg.mxu0
  %v858 = vadd.f32 %v287, %v855
  %v859 = vxor.u32 %v858, 2147483648
  %v860 = vmul.f32 %v859, 1.442695
  %v861 = vpow.pop %v860
  %v862 = vadd.f32 %v861, 1.0
  %v863 = vrcp.pop %v862
  %v864 = vmul.f32 %v862, %v863
  %v865 = vsub.f32 1.0, %v864
  %v866 = vmul.f32 %v863, %v865
  %v867 = vadd.f32 %v863, %v866
  %vm868 = vweird.f32 %v862
  %vm869 = vweird.f32 %v863
  %vm870 = vmor %vm868, %vm869
  %v871 = vsel %vm870, %v863, %v867
  %v872 = vand.u32 2147483647, %v862
  %vm873 = vcmp.eq.f32.partialorder %v872, 8.507059e+37
  %v874 = vand.u32 %v862, 2147483648
  %v875 = vor.u32 1.1754944e-38, %v874
  %v876 = vsel %vm873, %v875, %v871
  %v877 = vmul.f32 1.0, %v876
  %v878 = vtanh.pop %v858
  %v879 = vmul.f32 %v877, %v773
  %881 = vrot.lane.b32.xlu0 %v878, 32
  %v882 = vpop.permute.xlu0 %881
  %v884 = vmul.f32 %v877, %v882
  %886 = vrot.lane.b32.xlu0 %v884, 32
  %v887 = vpop.permute.xlu0 %886
  %v889 = vadd.f32 %v879, %v887
  %v890 = vtanh.pop %v889
  %892 = vrot.lane.b32.xlu0 %v890, 32
  %v893 = vpop.permute.xlu0 %892
  %v895 = vmul.f32 %v877, %v893
  %v896 = vpack.c.bf16 %v837, %v837
  %898 = vrot.lane.b32.xlu0 %v896, 64
  %v899 = vpop.permute.xlu0 %898
  %v901 = vsel %vm204, %v899, 0
  %903 = vmatpush.bf16.msra.mxu0 0
  %904 = vmatpush.bf16.msra.mxu0 0
  %905 = vmatpush.bf16.msra.mxu0 0
  %906 = vmatpush.bf16.msra.mxu0 0
  %907 = vmatpush.bf16.msra.mxu0 0
  %908 = vmatpush.bf16.msra.mxu0 0
  %909 = vmatpush.bf16.msra.mxu0 %v312
  %910 = vmatpush.bf16.msra.mxu0 %v311
  %911 = vmatmul.bf16.gmra.mxu0 %v901
  %v912 = vpop.f32.mrf.mxu0
  %v913 = vadd.f32 0.0, %v912
  %v914 = vpop.f32.mrf.mxu0
  %915 = vdwg.mxu0
  %v916 = vadd.f32 %v239, %v913
  %v917 = vxor.u32 %v916, 2147483648
  %v918 = vmul.f32 %v917, 1.442695
  %v919 = vpow.pop %v918
  %v920 = vadd.f32 %v919, 1.0
  %v921 = vrcp.pop %v920
  %v922 = vmul.f32 %v920, %v921
  %v923 = vsub.f32 1.0, %v922
  %v924 = vmul.f32 %v921, %v923
  %v925 = vadd.f32 %v921, %v924
  %vm926 = vweird.f32 %v920
  %vm927 = vweird.f32 %v921
  %vm928 = vmor %vm926, %vm927
  %v929 = vsel %vm928, %v921, %v925
  %v930 = vand.u32 2147483647, %v920
  %vm931 = vcmp.eq.f32.partialorder %v930, 8.507059e+37
  %v932 = vand.u32 %v920, 2147483648
  %v933 = vor.u32 1.1754944e-38, %v932
  %v934 = vsel %vm931, %v933, %v929
  %v935 = vmul.f32 1.0, %v934
  %v936 = vtanh.pop %v916
  %v937 = vmul.f32 %v935, %v831
  %939 = vrot.lane.b32.xlu0 %v936, 32
  %v940 = vpop.permute.xlu0 %939
  %v942 = vmul.f32 %v935, %v940
  %944 = vrot.lane.b32.xlu0 %v942, 32
  %v945 = vpop.permute.xlu0 %944
  %v947 = vadd.f32 %v937, %v945
  %v948 = vtanh.pop %v947
  %950 = vrot.lane.b32.xlu0 %v948, 32
  %v951 = vpop.permute.xlu0 %950
  %v953 = vmul.f32 %v935, %v951
  %v954 = vpack.c.bf16 %v895, %v895
  %956 = vrot.lane.b32.xlu0 %v954, 64
  %v957 = vpop.permute.xlu0 %956
  %v959 = vsel %vm204, %v957, 0
  %961 = vmatpush.bf16.msra.mxu0 0
  %962 = vmatpush.bf16.msra.mxu0 0
  %963 = vmatpush.bf16.msra.mxu0 0
  %964 = vmatpush.bf16.msra.mxu0 0
  %965 = vmatpush.bf16.msra.mxu0 0
  %966 = vmatpush.bf16.msra.mxu0 0
  %967 = vmatpush.bf16.msra.mxu0 %v378
  %968 = vmatpush.bf16.msra.mxu0 %v377
  %969 = vmatmul.bf16.gmra.mxu0 %v959
  %v970 = vpop.f32.mrf.mxu0
  %v971 = vadd.f32 0.0, %v970
  %v972 = vpop.f32.mrf.mxu0
  %973 = vdwg.mxu0
  %v974 = vadd.f32 %v285, %v971
  %v975 = vxor.u32 %v974, 2147483648
  %v976 = vmul.f32 %v975, 1.442695
  %v977 = vpow.pop %v976
  %v978 = vadd.f32 %v977, 1.0
  %v979 = vrcp.pop %v978
  %v980 = vmul.f32 %v978, %v979
  %v981 = vsub.f32 1.0, %v980
  %v982 = vmul.f32 %v979, %v981
  %v983 = vadd.f32 %v979, %v982
  %vm984 = vweird.f32 %v978
  %vm985 = vweird.f32 %v979
  %vm986 = vmor %vm984, %vm985
  %v987 = vsel %vm986, %v979, %v983
  %v988 = vand.u32 2147483647, %v978
  %vm989 = vcmp.eq.f32.partialorder %v988, 8.507059e+37
  %v990 = vand.u32 %v978, 2147483648
  %v991 = vor.u32 1.1754944e-38, %v990
  %v992 = vsel %vm989, %v991, %v987
  %v993 = vmul.f32 1.0, %v992
  %v994 = vtanh.pop %v974
  %v995 = vmul.f32 %v993, %v889
  %997 = vrot.lane.b32.xlu0 %v994, 32
  %v998 = vpop.permute.xlu0 %997
  %v1000 = vmul.f32 %v993, %v998
  %1002 = vrot.lane.b32.xlu0 %v1000, 32
  %v1003 = vpop.permute.xlu0 %1002
  %v1005 = vadd.f32 %v995, %v1003
  %v1006 = vtanh.pop %v1005
  %1008 = vrot.lane.b32.xlu0 %v1006, 32
  %v1009 = vpop.permute.xlu0 %1008
  %v1011 = vmul.f32 %v993, %v1009
  %v1012 = vpack.c.bf16 %v953, %v953
  %1014 = vrot.lane.b32.xlu0 %v1012, 64
  %v1015 = vpop.permute.xlu0 %1014
  %v1017 = vsel %vm204, %v1015, 0
  %1019 = vmatpush.bf16.msra.mxu0 0
  %1020 = vmatpush.bf16.msra.mxu0 0
  %1021 = vmatpush.bf16.msra.mxu0 0
  %1022 = vmatpush.bf16.msra.mxu0 0
  %1023 = vmatpush.bf16.msra.mxu0 0
  %1024 = vmatpush.bf16.msra.mxu0 0
  %1025 = vmatpush.bf16.msra.mxu0 %v312
  %1026 = vmatpush.bf16.msra.mxu0 %v311
  %1027 = vmatmul.bf16.gmra.mxu0 %v1017
  %v1028 = vpop.f32.mrf.mxu0
  %v1029 = vadd.f32 0.0, %v1028
  %v1030 = vpop.f32.mrf.mxu0
  %1031 = vdwg.mxu0
  %v1032 = vadd.f32 %v242, %v1029
  %v1033 = vxor.u32 %v1032, 2147483648
  %v1034 = vmul.f32 %v1033, 1.442695
  %v1035 = vpow.pop %v1034
  %v1036 = vadd.f32 %v1035, 1.0
  %v1037 = vrcp.pop %v1036
  %v1038 = vmul.f32 %v1036, %v1037
  %v1039 = vsub.f32 1.0, %v1038
  %v1040 = vmul.f32 %v1037, %v1039
  %v1041 = vadd.f32 %v1037, %v1040
  %vm1042 = vweird.f32 %v1036
  %vm1043 = vweird.f32 %v1037
  %vm1044 = vmor %vm1042, %vm1043
  %v1045 = vsel %vm1044, %v1037, %v1041
  %v1046 = vand.u32 2147483647, %v1036
  %vm1047 = vcmp.eq.f32.partialorder %v1046, 8.507059e+37
  %v1048 = vand.u32 %v1036, 2147483648
  %v1049 = vor.u32 1.1754944e-38, %v1048
  %v1050 = vsel %vm1047, %v1049, %v1045
  %v1051 = vmul.f32 1.0, %v1050
  %v1052 = vtanh.pop %v1032
  %v1053 = vmul.f32 %v1051, %v947
  %1055 = vrot.lane.b32.xlu0 %v1052, 32
  %v1056 = vpop.permute.xlu0 %1055
  %v1058 = vmul.f32 %v1051, %v1056
  %1060 = vrot.lane.b32.xlu0 %v1058, 32
  %v1061 = vpop.permute.xlu0 %1060
  %v1063 = vadd.f32 %v1053, %v1061
  %v1064 = vtanh.pop %v1063
  %1066 = vrot.lane.b32.xlu0 %v1064, 32
  %v1067 = vpop.permute.xlu0 %1066
  %v1069 = vmul.f32 %v1051, %v1067
  %v1070 = vpack.c.bf16 %v1011, %v1011
  %1072 = vrot.lane.b32.xlu0 %v1070, 64
  %v1073 = vpop.permute.xlu0 %1072
  %v1075 = vsel %vm204, %v1073, 0
  %1077 = vmatpush.bf16.msra.mxu0 0
  %1078 = vmatpush.bf16.msra.mxu0 0
  %1079 = vmatpush.bf16.msra.mxu0 0
  %1080 = vmatpush.bf16.msra.mxu0 0
  %1081 = vmatpush.bf16.msra.mxu0 0
  %1082 = vmatpush.bf16.msra.mxu0 0
  %1083 = vmatpush.bf16.msra.mxu0 %v378
  %1084 = vmatpush.bf16.msra.mxu0 %v377
  %1085 = vmatmul.bf16.gmra.mxu0 %v1075
  %v1086 = vpop.f32.mrf.mxu0
  %v1087 = vadd.f32 0.0, %v1086
  %v1088 = vpop.f32.mrf.mxu0
  %1089 = vdwg.mxu0
  %v1090 = vadd.f32 %v282, %v1087
  %v1091 = vxor.u32 %v1090, 2147483648
  %v1092 = vmul.f32 %v1091, 1.442695
  %v1093 = vpow.pop %v1092
  %v1094 = vadd.f32 %v1093, 1.0
  %v1095 = vrcp.pop %v1094
  %v1096 = vmul.f32 %v1094, %v1095
  %v1097 = vsub.f32 1.0, %v1096
  %v1098 = vmul.f32 %v1095, %v1097
  %v1099 = vadd.f32 %v1095, %v1098
  %vm1100 = vweird.f32 %v1094
  %vm1101 = vweird.f32 %v1095
  %vm1102 = vmor %vm1100, %vm1101
  %v1103 = vsel %vm1102, %v1095, %v1099
  %v1104 = vand.u32 2147483647, %v1094
  %vm1105 = vcmp.eq.f32.partialorder %v1104, 8.507059e+37
  %v1106 = vand.u32 %v1094, 2147483648
  %v1107 = vor.u32 1.1754944e-38, %v1106
  %v1108 = vsel %vm1105, %v1107, %v1103
  %v1109 = vmul.f32 1.0, %v1108
  %v1110 = vtanh.pop %v1090
  %v1111 = vmul.f32 %v1109, %v1005
  %1113 = vrot.lane.b32.xlu0 %v1110, 32
  %v1114 = vpop.permute.xlu0 %1113
  %v1116 = vmul.f32 %v1109, %v1114
  %1118 = vrot.lane.b32.xlu0 %v1116, 32
  %v1119 = vpop.permute.xlu0 %1118
  %v1121 = vadd.f32 %v1111, %v1119
  %v1122 = vtanh.pop %v1121
  %1124 = vrot.lane.b32.xlu0 %v1122, 32
  %v1125 = vpop.permute.xlu0 %1124
  %v1127 = vmul.f32 %v1109, %v1125
  %v1128 = vpack.c.bf16 %v1069, %v1069
  %1130 = vrot.lane.b32.xlu0 %v1128, 64
  %v1131 = vpop.permute.xlu0 %1130
  %v1133 = vsel %vm204, %v1131, 0
  %1135 = vmatpush.bf16.msra.mxu0 0
  %1136 = vmatpush.bf16.msra.mxu0 0
  %1137 = vmatpush.bf16.msra.mxu0 0
  %1138 = vmatpush.bf16.msra.mxu0 0
  %1139 = vmatpush.bf16.msra.mxu0 0
  %1140 = vmatpush.bf16.msra.mxu0 0
  %1141 = vmatpush.bf16.msra.mxu0 %v312
  %1142 = vmatpush.bf16.msra.mxu0 %v311
  %1143 = vmatmul.bf16.gmra.mxu0 %v1133
  %v1144 = vpop.f32.mrf.mxu0
  %v1145 = vadd.f32 0.0, %v1144
  %v1146 = vpop.f32.mrf.mxu0
  %1147 = vdwg.mxu0
  %v1148 = vadd.f32 %v244, %v1145
  %v1149 = vxor.u32 %v1148, 2147483648
  %v1150 = vmul.f32 %v1149, 1.442695
  %v1151 = vpow.pop %v1150
  %v1152 = vadd.f32 %v1151, 1.0
  %v1153 = vrcp.pop %v1152
  %v1154 = vmul.f32 %v1152, %v1153
  %v1155 = vsub.f32 1.0, %v1154
  %v1156 = vmul.f32 %v1153, %v1155
  %v1157 = vadd.f32 %v1153, %v1156
  %vm1158 = vweird.f32 %v1152
  %vm1159 = vweird.f32 %v1153
  %vm1160 = vmor %vm1158, %vm1159
  %v1161 = vsel %vm1160, %v1153, %v1157
  %v1162 = vand.u32 2147483647, %v1152
  %vm1163 = vcmp.eq.f32.partialorder %v1162, 8.507059e+37
  %v1164 = vand.u32 %v1152, 2147483648
  %v1165 = vor.u32 1.1754944e-38, %v1164
  %v1166 = vsel %vm1163, %v1165, %v1161
  %v1167 = vmul.f32 1.0, %v1166
  %v1168 = vtanh.pop %v1148
  %v1169 = vmul.f32 %v1167, %v1063
  %1171 = vrot.lane.b32.xlu0 %v1168, 32
  %v1172 = vpop.permute.xlu0 %1171
  %v1174 = vmul.f32 %v1167, %v1172
  %1176 = vrot.lane.b32.xlu0 %v1174, 32
  %v1177 = vpop.permute.xlu0 %1176
  %v1179 = vadd.f32 %v1169, %v1177
  %v1180 = vtanh.pop %v1179
  %1182 = vrot.lane.b32.xlu0 %v1180, 32
  %v1183 = vpop.permute.xlu0 %1182
  %v1185 = vmul.f32 %v1167, %v1183
  %v1186 = vpack.c.bf16 %v1127, %v1127
  %1188 = vrot.lane.b32.xlu0 %v1186, 64
  %v1189 = vpop.permute.xlu0 %1188
  %v1191 = vsel %vm204, %v1189, 0
  %1193 = vmatpush.bf16.msra.mxu0 0
  %1194 = vmatpush.bf16.msra.mxu0 0
  %1195 = vmatpush.bf16.msra.mxu0 0
  %1196 = vmatpush.bf16.msra.mxu0 0
  %1197 = vmatpush.bf16.msra.mxu0 0
  %1198 = vmatpush.bf16.msra.mxu0 0
  %1199 = vmatpush.bf16.msra.mxu0 %v378
  %1200 = vmatpush.bf16.msra.mxu0 %v377
  %1201 = vmatmul.bf16.gmra.mxu0 %v1191
  %v1202 = vpop.f32.mrf.mxu0
  %v1203 = vadd.f32 0.0, %v1202
  %v1204 = vpop.f32.mrf.mxu0
  %1205 = vdwg.mxu0
  %v1206 = vadd.f32 %v280, %v1203
  %v1207 = vxor.u32 %v1206, 2147483648
  %v1208 = vmul.f32 %v1207, 1.442695
  %v1209 = vpow.pop %v1208
  %v1210 = vadd.f32 %v1209, 1.0
  %v1211 = vrcp.pop %v1210
  %v1212 = vmul.f32 %v1210, %v1211
  %v1213 = vsub.f32 1.0, %v1212
  %v1214 = vmul.f32 %v1211, %v1213
  %v1215 = vadd.f32 %v1211, %v1214
  %vm1216 = vweird.f32 %v1210
  %vm1217 = vweird.f32 %v1211
  %vm1218 = vmor %vm1216, %vm1217
  %v1219 = vsel %vm1218, %v1211, %v1215
  %v1220 = vand.u32 2147483647, %v1210
  %vm1221 = vcmp.eq.f32.partialorder %v1220, 8.507059e+37
  %v1222 = vand.u32 %v1210, 2147483648
  %v1223 = vor.u32 1.1754944e-38, %v1222
  %v1224 = vsel %vm1221, %v1223, %v1219
  %v1225 = vmul.f32 1.0, %v1224
  %v1226 = vtanh.pop %v1206
  %v1227 = vmul.f32 %v1225, %v1121
  %1229 = vrot.lane.b32.xlu0 %v1226, 32
  %v1230 = vpop.permute.xlu0 %1229
  %v1232 = vmul.f32 %v1225, %v1230
  %1234 = vrot.lane.b32.xlu0 %v1232, 32
  %v1235 = vpop.permute.xlu0 %1234
  %v1237 = vadd.f32 %v1227, %v1235
  %v1238 = vtanh.pop %v1237
  %1240 = vrot.lane.b32.xlu0 %v1238, 32
  %v1241 = vpop.permute.xlu0 %1240
  %v1243 = vmul.f32 %v1225, %v1241
  %v1244 = vld [vmem:[%s8] sm:$0xf]
  %v1245 = vld [vmem:[%s8 + $0x4] sm:$0xf]
  %v1246 = vld [vmem:[%s8 + $0x8] sm:$0xf]
  %v1247 = vld [vmem:[%s8 + $0xc] sm:$0xf]
  %v1248 = vpack.c.bf16 %v489, %v368
  %v1249 = vpack.c.bf16 %v721, %v605
  %v1250 = vpack.c.bf16 %v953, %v837
  %v1251 = vpack.c.bf16 %v1185, %v1069
  %v1252 = vld [vmem:[%s8 + $0x10] sm:$0xf]
  %v1253 = vld [vmem:[%s8 + $0x14] sm:$0xf]
  %v1254 = vld [vmem:[%s8 + $0x18] sm:$0xf]
  %v1255 = vld [vmem:[%s8 + $0x1c] sm:$0xf]
  %v1256 = vpack.c.bf16 %v1127, %v1243
  %v1257 = vpack.c.bf16 %v895, %v1011
  %v1258 = vpack.c.bf16 %v663, %v779
  %v1259 = vpack.c.bf16 %v431, %v547
  %1264 = vrot.lane.b32.xlu0 %v1256, 64
  %v1265 = vpop.permute.xlu0 %1264
  %1266 = vrot.lane.b32.xlu0 %v1257, 64
  %v1267 = vpop.permute.xlu0 %1266
  %1268 = vrot.lane.b32.xlu0 %v1258, 64
  %v1269 = vpop.permute.xlu0 %1268
  %1270 = vrot.lane.b32.xlu0 %v1259, 64
  %v1271 = vpop.permute.xlu0 %1270
  %v1276 = vunpack.c.l.b16 %v1252
  %v1277 = vunpack.c.l.b16 %v1253
  %v1278 = vunpack.c.l.b16 %v1254
  %v1279 = vunpack.c.l.b16 %v1255
  %v1280 = vpack.c.b16 %v1277, %v1276
  %v1281 = vpack.c.b16 %v1279, %v1278
  %v1285 = vsel %vm204, %v1265, 0
  %v1288 = vsel %vm204, %v1267, 0
  %v1291 = vsel %vm204, %v1269, 0
  %v1294 = vsel %vm204, %v1271, 0
  %1296 = vmatpush.bf16.msra.mxu0 0
  %1297 = vmatpush.bf16.msra.mxu0 0
  %1298 = vmatpush.bf16.msra.mxu0 0
  %1299 = vmatpush.bf16.msra.mxu0 0
  %1300 = vmatpush.bf16.msra.mxu0 0
  %1301 = vmatpush.bf16.msra.mxu0 0
  %1302 = vmatpush.bf16.msra.mxu0 %v1281
  %1303 = vmatpush.bf16.msra.mxu0 %v1280
  %1304 = vmatmul.bf16.gmra.mxu0 %v1285
  %v1305 = vpop.f32.mrf.mxu0
  %v1306 = vadd.f32 0.0, %v1305
  %v1307 = vpop.f32.mrf.mxu0
  %v1308 = vadd.f32 0.0, %v1307
  %1309 = vmatmul.bf16.gmra.mxu0 %v1288
  %v1310 = vpop.f32.mrf.mxu0
  %v1311 = vadd.f32 0.0, %v1310
  %v1312 = vpop.f32.mrf.mxu0
  %v1313 = vadd.f32 0.0, %v1312
  %1314 = vmatmul.bf16.gmra.mxu0 %v1291
  %v1315 = vpop.f32.mrf.mxu0
  %v1316 = vadd.f32 0.0, %v1315
  %v1317 = vpop.f32.mrf.mxu0
  %v1318 = vadd.f32 0.0, %v1317
  %1319 = vmatmul.bf16.gmra.mxu0 %v1294
  %v1320 = vpop.f32.mrf.mxu0
  %v1321 = vadd.f32 0.0, %v1320
  %v1322 = vpop.f32.mrf.mxu0
  %v1323 = vadd.f32 0.0, %v1322
  %1324 = vdwg.mxu0
  %1329 = vrot.lane.b32.xlu0 %v1248, 64
  %v1330 = vpop.permute.xlu0 %1329
  %1331 = vrot.lane.b32.xlu0 %v1249, 64
  %v1332 = vpop.permute.xlu0 %1331
  %1333 = vrot.lane.b32.xlu0 %v1250, 64
  %v1334 = vpop.permute.xlu0 %1333
  %1335 = vrot.lane.b32.xlu0 %v1251, 64
  %v1336 = vpop.permute.xlu0 %1335
  %v1341 = vunpack.c.l.b16 %v1244
  %v1342 = vunpack.c.l.b16 %v1245
  %v1343 = vunpack.c.l.b16 %v1246
  %v1344 = vunpack.c.l.b16 %v1247
  %v1345 = vpack.c.b16 %v1342, %v1341
  %v1346 = vpack.c.b16 %v1344, %v1343
  %v1350 = vsel %vm204, %v1330, 0
  %v1353 = vsel %vm204, %v1332, 0
  %v1356 = vsel %vm204, %v1334, 0
  %v1359 = vsel %vm204, %v1336, 0
  %1361 = vmatpush.bf16.msra.mxu0 0
  %1362 = vmatpush.bf16.msra.mxu0 0
  %1363 = vmatpush.bf16.msra.mxu0 0
  %1364 = vmatpush.bf16.msra.mxu0 0
  %1365 = vmatpush.bf16.msra.mxu0 0
  %1366 = vmatpush.bf16.msra.mxu0 0
  %1367 = vmatpush.bf16.msra.mxu0 %v1346
  %1368 = vmatpush.bf16.msra.mxu0 %v1345
  %1369 = vmatmul.bf16.gmra.mxu0 %v1350
  %v1370 = vpop.f32.mrf.mxu0
  %v1371 = vadd.f32 %v1306, %v1370
  %v1372 = vpop.f32.mrf.mxu0
  %v1373 = vadd.f32 %v1308, %v1372
  %1374 = vmatmul.bf16.gmra.mxu0 %v1353
  %v1375 = vpop.f32.mrf.mxu0
  %v1376 = vadd.f32 %v1311, %v1375
  %v1377 = vpop.f32.mrf.mxu0
  %v1378 = vadd.f32 %v1313, %v1377
  %1379 = vmatmul.bf16.gmra.mxu0 %v1356
  %v1380 = vpop.f32.mrf.mxu0
  %v1381 = vadd.f32 %v1316, %v1380
  %v1382 = vpop.f32.mrf.mxu0
  %v1383 = vadd.f32 %v1318, %v1382
  %1384 = vmatmul.bf16.gmra.mxu0 %v1359
  %v1385 = vpop.f32.mrf.mxu0
  %v1386 = vadd.f32 %v1321, %v1385
  %v1387 = vpop.f32.mrf.mxu0
  %v1388 = vadd.f32 %v1323, %v1387
  %1389 = vdwg.mxu0
  %v1390 = vld [vmem:[%s9] sm:$0x1]
  %v1392 = vperm.slane %v1390, 0
  %v1394 = vadd.f32 %v1371, %v1392
  %v1395 = vadd.f32 %v1373, %v1392
  %v1396 = vadd.f32 %v1376, %v1392
  %v1397 = vadd.f32 %v1378, %v1392
  %v1398 = vadd.f32 %v1381, %v1392
  %v1399 = vadd.f32 %v1383, %v1392
  %v1400 = vadd.f32 %v1386, %v1392
  %v1401 = vadd.f32 %v1388, %v1392
  %v1402 = vmax.f32 %v1394, 0.0
  %v1403 = vmax.f32 %v1395, 0.0
  %v1404 = vmax.f32 %v1396, 0.0
  %v1405 = vmax.f32 %v1397, 0.0
  %v1406 = vmax.f32 %v1398, 0.0
  %v1407 = vmax.f32 %v1399, 0.0
  %v1408 = vmax.f32 %v1400, 0.0
  %v1409 = vmax.f32 %v1401, 0.0
  %v1410 = vld [vmem:[%s10] sm:$0x1]
  %v1411 = vld [vmem:[#allocation2] sm:$0x1]
  %v1413 = vperm.slane %v1410, 0
  %v1415 = vmul.f32 %v1402, %v1413
  %v1416 = vmul.f32 %v1403, %v1413
  %v1417 = vmul.f32 %v1404, %v1413
  %v1418 = vmul.f32 %v1405, %v1413
  %v1419 = vmul.f32 %v1406, %v1413
  %v1420 = vmul.f32 %v1407, %v1413
  %v1421 = vmul.f32 %v1408, %v1413
  %v1422 = vmul.f32 %v1409, %v1413
  %v1423 = vsel %vm204, %v1415, 0.0
  %1424 = vadd.xlane.f32.xlu0 %v1423
  %v1425 = vpop.xlane.xlu0 %1424
  %v1426 = vsel %vm204, %v1416, 0.0
  %1427 = vadd.xlane.f32.xlu0 %v1426
  %v1428 = vpop.xlane.xlu0 %1427
  %v1429 = vsel %vm204, %v1417, 0.0
  %1430 = vadd.xlane.f32.xlu0 %v1429
  %v1431 = vpop.xlane.xlu0 %1430
  %v1432 = vsel %vm204, %v1418, 0.0
  %1433 = vadd.xlane.f32.xlu0 %v1432
  %v1434 = vpop.xlane.xlu0 %1433
  %v1435 = vsel %vm204, %v1419, 0.0
  %1436 = vadd.xlane.f32.xlu0 %v1435
  %v1437 = vpop.xlane.xlu0 %1436
  %v1438 = vsel %vm204, %v1420, 0.0
  %1439 = vadd.xlane.f32.xlu0 %v1438
  %v1440 = vpop.xlane.xlu0 %1439
  %v1441 = vsel %vm204, %v1421, 0.0
  %1442 = vadd.xlane.f32.xlu0 %v1441
  %v1443 = vpop.xlane.xlu0 %1442
  %v1444 = vsel %vm204, %v1422, 0.0
  %1445 = vadd.xlane.f32.xlu0 %v1444
  %v1446 = vpop.xlane.xlu0 %1445
  %v1448 = vperm.slane %v1411, 0
  %1449 = vset.pattern.permute.xlu0 0
  %1450 = vperm.xlu0 %1449, %v1448
  %v1451 = vpop.permute.xlu0 %1450
  %v1453 = vadd.f32 %v1425, %v1451
  %v1454 = vadd.f32 %v1428, %v1451
  %v1455 = vadd.f32 %v1431, %v1451
  %v1456 = vadd.f32 %v1434, %v1451
  %v1457 = vadd.f32 %v1437, %v1451
  %v1458 = vadd.f32 %v1440, %v1451
  %v1459 = vadd.f32 %v1443, %v1451
  %v1460 = vadd.f32 %v1446, %v1451
  %v1461 = vxor.u32 %v1453, 2147483648
  %v1462 = vxor.u32 %v1454, 2147483648
  %v1463 = vxor.u32 %v1455, 2147483648
  %v1464 = vxor.u32 %v1456, 2147483648
  %v1465 = vxor.u32 %v1457, 2147483648
  %v1466 = vxor.u32 %v1458, 2147483648
  %v1467 = vxor.u32 %v1459, 2147483648
  %v1468 = vxor.u32 %v1460, 2147483648
  %v1469 = vmul.f32 %v1461, 1.442695
  %v1470 = vpow.pop %v1469
  %v1471 = vmul.f32 %v1462, 1.442695
  %v1472 = vpow.pop %v1471
  %v1473 = vmul.f32 %v1463, 1.442695
  %v1474 = vpow.pop %v1473
  %v1475 = vmul.f32 %v1464, 1.442695
  %v1476 = vpow.pop %v1475
  %v1477 = vmul.f32 %v1465, 1.442695
  %v1478 = vpow.pop %v1477
  %v1479 = vmul.f32 %v1466, 1.442695
  %v1480 = vpow.pop %v1479
  %v1481 = vmul.f32 %v1467, 1.442695
  %v1482 = vpow.pop %v1481
  %v1483 = vmul.f32 %v1468, 1.442695
  %v1484 = vpow.pop %v1483
  %v1485 = vadd.f32 %v1470, 1.0
  %v1486 = vadd.f32 %v1472, 1.0
  %v1487 = vadd.f32 %v1474, 1.0
  %v1488 = vadd.f32 %v1476, 1.0
  %v1489 = vadd.f32 %v1478, 1.0
  %v1490 = vadd.f32 %v1480, 1.0
  %v1491 = vadd.f32 %v1482, 1.0
  %v1492 = vadd.f32 %v1484, 1.0
  %v1493 = vrcp.pop %v1485
  %v1494 = vmul.f32 %v1485, %v1493
  %v1495 = vsub.f32 1.0, %v1494
  %v1496 = vmul.f32 %v1493, %v1495
  %v1497 = vadd.f32 %v1493, %v1496
  %vm1498 = vweird.f32 %v1485
  %vm1499 = vweird.f32 %v1493
  %vm1500 = vmor %vm1498, %vm1499
  %v1501 = vsel %vm1500, %v1493, %v1497
  %v1502 = vand.u32 2147483647, %v1485
  %vm1503 = vcmp.eq.f32.partialorder %v1502, 8.507059e+37
  %v1504 = vand.u32 %v1485, 2147483648
  %v1505 = vor.u32 1.1754944e-38, %v1504
  %v1506 = vsel %vm1503, %v1505, %v1501
  %v1507 = vmul.f32 1.0, %v1506
  %v1508 = vrcp.pop %v1486
  %v1509 = vmul.f32 %v1486, %v1508
  %v1510 = vsub.f32 1.0, %v1509
  %v1511 = vmul.f32 %v1508, %v1510
  %v1512 = vadd.f32 %v1508, %v1511
  %vm1513 = vweird.f32 %v1486
  %vm1514 = vweird.f32 %v1508
  %vm1515 = vmor %vm1513, %vm1514
  %v1516 = vsel %vm1515, %v1508, %v1512
  %v1517 = vand.u32 2147483647, %v1486
  %vm1518 = vcmp.eq.f32.partialorder %v1517, 8.507059e+37
  %v1519 = vand.u32 %v1486, 2147483648
  %v1520 = vor.u32 1.1754944e-38, %v1519
  %v1521 = vsel %vm1518, %v1520, %v1516
  %v1522 = vmul.f32 1.0, %v1521
  %v1523 = vrcp.pop %v1487
  %v1524 = vmul.f32 %v1487, %v1523
  %v1525 = vsub.f32 1.0, %v1524
  %v1526 = vmul.f32 %v1523, %v1525
  %v1527 = vadd.f32 %v1523, %v1526
  %vm1528 = vweird.f32 %v1487
  %vm1529 = vweird.f32 %v1523
  %vm1530 = vmor %vm1528, %vm1529
  %v1531 = vsel %vm1530, %v1523, %v1527
  %v1532 = vand.u32 2147483647, %v1487
  %vm1533 = vcmp.eq.f32.partialorder %v1532, 8.507059e+37
  %v1534 = vand.u32 %v1487, 2147483648
  %v1535 = vor.u32 1.1754944e-38, %v1534
  %v1536 = vsel %vm1533, %v1535, %v1531
  %v1537 = vmul.f32 1.0, %v1536
  %v1538 = vrcp.pop %v1488
  %v1539 = vmul.f32 %v1488, %v1538
  %v1540 = vsub.f32 1.0, %v1539
  %v1541 = vmul.f32 %v1538, %v1540
  %v1542 = vadd.f32 %v1538, %v1541
  %vm1543 = vweird.f32 %v1488
  %vm1544 = vweird.f32 %v1538
  %vm1545 = vmor %vm1543, %vm1544
  %v1546 = vsel %vm1545, %v1538, %v1542
  %v1547 = vand.u32 2147483647, %v1488
  %vm1548 = vcmp.eq.f32.partialorder %v1547, 8.507059e+37
  %v1549 = vand.u32 %v1488, 2147483648
  %v1550 = vor.u32 1.1754944e-38, %v1549
  %v1551 = vsel %vm1548, %v1550, %v1546
  %v1552 = vmul.f32 1.0, %v1551
  %v1553 = vrcp.pop %v1489
  %v1554 = vmul.f32 %v1489, %v1553
  %v1555 = vsub.f32 1.0, %v1554
  %v1556 = vmul.f32 %v1553, %v1555
  %v1557 = vadd.f32 %v1553, %v1556
  %vm1558 = vweird.f32 %v1489
  %vm1559 = vweird.f32 %v1553
  %vm1560 = vmor %vm1558, %vm1559
  %v1561 = vsel %vm1560, %v1553, %v1557
  %v1562 = vand.u32 2147483647, %v1489
  %vm1563 = vcmp.eq.f32.partialorder %v1562, 8.507059e+37
  %v1564 = vand.u32 %v1489, 2147483648
  %v1565 = vor.u32 1.1754944e-38, %v1564
  %v1566 = vsel %vm1563, %v1565, %v1561
  %v1567 = vmul.f32 1.0, %v1566
  %v1568 = vrcp.pop %v1490
  %v1569 = vmul.f32 %v1490, %v1568
  %v1570 = vsub.f32 1.0, %v1569
  %v1571 = vmul.f32 %v1568, %v1570
  %v1572 = vadd.f32 %v1568, %v1571
  %vm1573 = vweird.f32 %v1490
  %vm1574 = vweird.f32 %v1568
  %vm1575 = vmor %vm1573, %vm1574
  %v1576 = vsel %vm1575, %v1568, %v1572
  %v1577 = vand.u32 2147483647, %v1490
  %vm1578 = vcmp.eq.f32.partialorder %v1577, 8.507059e+37
  %v1579 = vand.u32 %v1490, 2147483648
  %v1580 = vor.u32 1.1754944e-38, %v1579
  %v1581 = vsel %vm1578, %v1580, %v1576
  %v1582 = vmul.f32 1.0, %v1581
  %v1583 = vrcp.pop %v1491
  %v1584 = vmul.f32 %v1491, %v1583
  %v1585 = vsub.f32 1.0, %v1584
  %v1586 = vmul.f32 %v1583, %v1585
  %v1587 = vadd.f32 %v1583, %v1586
  %vm1588 = vweird.f32 %v1491
  %vm1589 = vweird.f32 %v1583
  %vm1590 = vmor %vm1588, %vm1589
  %v1591 = vsel %vm1590, %v1583, %v1587
  %v1592 = vand.u32 2147483647, %v1491
  %vm1593 = vcmp.eq.f32.partialorder %v1592, 8.507059e+37
  %v1594 = vand.u32 %v1491, 2147483648
  %v1595 = vor.u32 1.1754944e-38, %v1594
  %v1596 = vsel %vm1593, %v1595, %v1591
  %v1597 = vmul.f32 1.0, %v1596
  %v1598 = vrcp.pop %v1492
  %v1599 = vmul.f32 %v1492, %v1598
  %v1600 = vsub.f32 1.0, %v1599
  %v1601 = vmul.f32 %v1598, %v1600
  %v1602 = vadd.f32 %v1598, %v1601
  %vm1603 = vweird.f32 %v1492
  %vm1604 = vweird.f32 %v1598
  %vm1605 = vmor %vm1603, %vm1604
  %v1606 = vsel %vm1605, %v1598, %v1602
  %v1607 = vand.u32 2147483647, %v1492
  %vm1608 = vcmp.eq.f32.partialorder %v1607, 8.507059e+37
  %v1609 = vand.u32 %v1492, 2147483648
  %v1610 = vor.u32 1.1754944e-38, %v1609
  %v1611 = vsel %vm1608, %v1610, %v1606
  %v1612 = vmul.f32 1.0, %v1611
  %v1621 = vperm.slane %v1507, %v53
  %v1622 = vperm.slane %v1522, %v53
  %v1623 = vperm.slane %v1537, %v53
  %v1624 = vperm.slane %v1552, %v53
  %v1625 = vperm.slane %v1567, %v53
  %v1626 = vperm.slane %v1582, %v53
  %v1627 = vperm.slane %v1597, %v53
  %v1628 = vperm.slane %v1612, %v53
  %vm1629 = vcmask 1041409
  %v1630 = vsel %vm1629, %v1622, %v1621
  %vm1631 = vcmask 1042434
  %v1632 = vsel %vm1631, %v1623, %v1630
  %vm1633 = vcmask 1043459
  %v1634 = vsel %vm1633, %v1624, %v1632
  %vm1635 = vcmask 1044484
  %v1636 = vsel %vm1635, %v1625, %v1634
  %vm1637 = vcmask 1045509
  %v1638 = vsel %vm1637, %v1626, %v1636
  %vm1639 = vcmask 1046534
  %v1640 = vsel %vm1639, %v1627, %v1638
  %vm1641 = vcmask 1047559
  %v1642 = vsel %vm1641, %v1628, %v1640
  %vm1644 = vcmask 64512
  %1645 = vst.msk [vmem:[%s12] sm:$0xff] %vm1644, %v1642
  // Predicated region
  $region50: #{amr_baseline_forward.1} parent=0 // pred_check
    _
  $region51: #{amr_baseline_forward.1} parent=0 // pred_check_branch
    %1647 = sbr.rel (0) target = $region53
  $region52: #{amr_baseline_forward.1} parent=0 // pred_region
    _
  $region53: #{amr_baseline_forward.1} parent=0 // pred_fallthru
    _
  // Predicated region
  $region54: #{amr_baseline_forward.1} parent=0 // pred_check
    _
  $region55: #{amr_baseline_forward.1} parent=0 // pred_check_branch
    %1649 = sbr.rel (0) target = $region57
  $region56: #{amr_baseline_forward.1} parent=0 // pred_region
    _
  $region57: #{amr_baseline_forward.1} parent=0 // pred_fallthru
    _

</llo_original>
